<compile_context>
chip_gen: v5e
topology: v5e:2x2
jax: 0.10.0
libtpu: 0.0.40
codegen_flags: <defaults>
</compile_context>

<pallas_src>
import jax
import jax.numpy as jnp
from jax.experimental import pallas as pl
from jax.experimental.pallas import tpu as pltpu


# ----------------------------------------------------------------------------
# Fused kernel: conv0 + conv1 + discriminator + 3-layer classifier.
# ----------------------------------------------------------------------------
def _hybjim_fused_kernel(x_ref, b0_ref, b1_ref,
                         dw_ref, db_ref,
                         f1w_ref, f1b_ref, f2w_ref, f2b_ref, f3w_ref, f3b_ref,
                         out_ref):
    nc = f3w_ref.shape[1]
    xb = x_ref[...]                                                   # (TB, C*F*W) bf16

    # conv0 (+relu) as one banded matmul: (TB, C*F*W) @ (C*F*W, W1*48)
    h0 = jnp.dot(xb, b0_ref[...], preferred_element_type=jnp.float32)
    h0 = jnp.maximum(h0, 0.0).astype(jnp.bfloat16)                    # (TB, W1*48)

    # conv1 (+relu) as one banded matmul: (TB, W1*48) @ (W1*48, 8*W2).
    # Output columns are already in PyTorch NCHW .view flatten order.
    flat = jnp.dot(h0, b1_ref[...], preferred_element_type=jnp.float32)
    flat = jnp.maximum(flat, 0.0).astype(jnp.bfloat16)                # (TB, 8*W2)

    # Discriminator head: sigmoid(flat @ dw + db)
    d = jnp.dot(flat, dw_ref[...], preferred_element_type=jnp.float32) + db_ref[...]
    y = 1.0 / (1.0 + jnp.exp(-d))                                     # (TB, 1)

    # ClassifierNetFc3 (dropout disabled): fc1 -> relu -> fc2 -> relu -> fc3
    z = jnp.dot(flat, f1w_ref[...], preferred_element_type=jnp.float32) + f1b_ref[...]
    z = jnp.maximum(z, 0.0).astype(jnp.bfloat16)
    z = jnp.dot(z, f2w_ref[...], preferred_element_type=jnp.float32) + f2b_ref[...]
    z = jnp.maximum(z, 0.0).astype(jnp.bfloat16)
    logits = (jnp.dot(z, f3w_ref[...], preferred_element_type=jnp.float32)
              + f3b_ref[...])                                         # (TB, nc)

    # Packed output: [:, :nc] = logits, [:, nc:] = discriminator probability.
    out_ref[:, 0:nc] = logits
    out_ref[:, nc:nc + 1] = y


def _choose_batch_tile(b):
    """Batch tile: multiple of 8 (sublane tiling of the 2nd-minor block dim),
    capped at 256 so double-buffered blocks stay far below v5e's 16 MiB scoped
    VMEM default and v7x's 64 MiB VMEM; prefer >=2 grid steps so v7x's two
    TensorCores both get work under dimension_semantics=("parallel",)."""
    b8 = ((b + 7) // 8) * 8
    tb = min(256, max(8, ((b8 // 2) // 8) * 8))
    bp = ((b8 + tb - 1) // tb) * tb
    return tb, bp


def hybjim_forward(prepped, x):
    """x: (B, C, F, W) NCHW.  Returns (logits (B, n_classes), y (B, 1))."""
    B = x.shape[0]
    cfw, n0 = prepped["band0"].shape          # (C*F*W, W1*48)
    n1 = prepped["band1"].shape[1]            # 8*W2
    h1 = prepped["fc1_w"].shape[1]
    h2 = prepped["fc2_w"].shape[1]
    nc = prepped["fc3_w"].shape[1]

    # NCHW flatten of the raw input == row order of the banded conv0 weight.
    x2d = x.reshape(B, -1).astype(jnp.bfloat16)
    tb, bp = _choose_batch_tile(B)
    if bp != B:
        x2d = jnp.pad(x2d, ((0, bp - B), (0, 0)))

    const = lambda i: (0, 0)                  # weights: constant block -> VMEM resident
    out = pl.pallas_call(
        _hybjim_fused_kernel,
        out_shape=jax.ShapeDtypeStruct((bp, nc + 1), jnp.float32),
        grid=(bp // tb,),
        in_specs=[
            pl.BlockSpec((tb, cfw), lambda i: (i, 0)),   # input batch tile
            pl.BlockSpec((cfw, n0), const),              # banded conv0 weight
            pl.BlockSpec((n0, n1), const),               # banded conv1 weight
            pl.BlockSpec((n1, 1), const),                # discriminator weight
            pl.BlockSpec((1, 1), const),                 # discriminator bias
            pl.BlockSpec((n1, h1), const),               # fc1 weight
            pl.BlockSpec((1, h1), const),                # fc1 bias
            pl.BlockSpec((h1, h2), const),               # fc2 weight
            pl.BlockSpec((1, h2), const),                # fc2 bias
            pl.BlockSpec((h2, nc), const),               # fc3 weight
            pl.BlockSpec((1, nc), const),                # fc3 bias
        ],
        out_specs=pl.BlockSpec((tb, nc + 1), lambda i: (i, 0)),
        compiler_params=pltpu.CompilerParams(
            dimension_semantics=("parallel",)),
    )(x2d, prepped["band0"], prepped["band1"],
      prepped["disc_w"], prepped["disc_b"],
      prepped["fc1_w"], prepped["fc1_b"],
      prepped["fc2_w"], prepped["fc2_b"],
      prepped["fc3_w"], prepped["fc3_b"])

    out = out[:B]
    return out[:, :nc], out[:, nc:nc + 1]


# ----------------------------------------------------------------------------
# One-time parameter preprocessing (hoisted out of the forward pass).
# ----------------------------------------------------------------------------
def _make_band0(w_conv0, n_frames):
    """(Co, C, F, KW) conv0 weight -> banded (C*F*W, W1*Co) matrix so that
    x.reshape(B, C*F*W) @ band0 == conv0(x); output columns (w1*Co + co)."""
    co, c, f, kw = w_conv0.shape
    cf = c * f
    w = n_frames
    w1 = w - kw + 1
    wr = jnp.transpose(w_conv0.reshape(co, cf, kw), (1, 2, 0))     # (cf, kw, co)
    band = jnp.zeros((cf, w, w1, co), jnp.float32)
    for i in range(w1):
        band = band.at[:, i:i + kw, i, :].set(wr)
    return band.reshape(cf * w, w1 * co)


def _make_band1(w_conv1, w1):
    """(Co, Ci, 1, KW) conv1 weight -> banded (W1*Ci, Co*W2) matrix; output
    columns (co*W2 + w2), i.e. exactly PyTorch's NCHW .view flatten order."""
    co, ci, _, kw = w_conv1.shape
    w2 = w1 - kw + 1
    wr = jnp.transpose(w_conv1[:, :, 0, :], (2, 1, 0))             # (kw, ci, co)
    band = jnp.zeros((w1, ci, co, w2), jnp.float32)
    for i in range(w2):
        band = band.at[i:i + kw, :, :, i].set(wr)
    return band.reshape(w1 * ci, co * w2)


def prepare_params(params, data_size):
    """Build banded conv matrices and cast all MXU operands to bf16 (once)."""
    _, _, n_frames = data_size
    kw0 = params["w_conv0"].shape[3]
    w1 = n_frames - kw0 + 1
    bf = jnp.bfloat16
    return dict(
        band0=_make_band0(params["w_conv0"], n_frames).astype(bf),
        band1=_make_band1(params["w_conv1"], w1).astype(bf),
        disc_w=params["disc_w"].astype(bf), disc_b=params["disc_b"],
        fc1_w=params["fc1_w"].astype(bf), fc1_b=params["fc1_b"],
        fc2_w=params["fc2_w"].astype(bf), fc2_b=params["fc2_b"],
        fc3_w=params["fc3_w"].astype(bf), fc3_b=params["fc3_b"],
    )


# ----------------------------------------------------------------------------
# Parameters (stored in PyTorch-equivalent layout / flatten order).
# ----------------------------------------------------------------------------
def init_hybjim_params(key, n_classes, data_size):
    n_channels, n_features, n_frames = data_size
    w1 = n_frames - 20 + 1
    w2 = w1 - 5 + 1
    conv_out_flat = 8 * 1 * w2

    keys = jax.random.split(key, 6)
    std = 0.02  # TODO(synk): exact AdvBasics.weights_init scheme not in the prompt; normal(0,0.02) assumed.
    h1, h2 = 64, 32  # TODO(synk): ClassifierNetFc3 hidden sizes not in the prompt; 64/32 assumed.

    return dict(
        w_conv0=jax.random.normal(keys[0], (48, n_channels, n_features, 20), jnp.float32) * std,
        w_conv1=jax.random.normal(keys[1], (8, 48, 1, 5), jnp.float32) * std,
        # FC weight rows use PyTorch's NCHW flatten order (c * W2 + w).
        fc1_w=jax.random.normal(keys[2], (conv_out_flat, h1), jnp.float32) * std,
        fc1_b=jnp.zeros((1, h1), jnp.float32),
        fc2_w=jax.random.normal(keys[3], (h1, h2), jnp.float32) * std,
        fc2_b=jnp.zeros((1, h2), jnp.float32),
        fc3_w=jax.random.normal(keys[4], (h2, n_classes), jnp.float32) * std,
        fc3_b=jnp.zeros((1, n_classes), jnp.float32),
        disc_w=jax.random.normal(keys[5], (conv_out_flat, 1), jnp.float32) * std,
        disc_b=jnp.zeros((1, 1), jnp.float32),
    )


# ----------------------------------------------------------------------------
# Pure-JAX reference (independent of the kernel's banded-matmul trick).
# ----------------------------------------------------------------------------
def reference_forward(params, x):
    dn = ("NCHW", "OIHW", "NCHW")
    prec = jax.lax.Precision.HIGHEST
    h = jax.lax.conv_general_dilated(x, params["w_conv0"], (1, 1), "VALID",
                                     dimension_numbers=dn, precision=prec)
    h = jnp.maximum(h, 0.0)
    h = jax.lax.conv_general_dilated(h, params["w_conv1"], (1, 1), "VALID",
                                     dimension_numbers=dn, precision=prec)
    h = jnp.maximum(h, 0.0)
    flat = h.reshape(h.shape[0], -1)                               # NCHW flatten (= .view)
    y = 1.0 / (1.0 + jnp.exp(-(jnp.dot(flat, params["disc_w"], precision=prec)
                               + params["disc_b"])))
    z = jnp.maximum(jnp.dot(flat, params["fc1_w"], precision=prec) + params["fc1_b"], 0.0)
    z = jnp.maximum(jnp.dot(z, params["fc2_w"], precision=prec) + params["fc2_b"], 0.0)
    logits = jnp.dot(z, params["fc3_w"], precision=prec) + params["fc3_b"]
    return logits, y


if __name__ == "__main__":
    n_classes = 4
    data_size = (1, 13, 32)      # (n_channels, n_features, n_frames)
    batch = 16                   # -> two batch tiles of 8 (multi-step "parallel" grid)

    root = jax.random.PRNGKey(0)
    k_param, k_input = jax.random.split(root)

    params = init_hybjim_params(k_param, n_classes, data_size)
    prepped = prepare_params(params, data_size)
    x = jax.random.normal(k_input, (batch,) + data_size, jnp.float32)

    fwd = jax.jit(hybjim_forward)
    logits, y = fwd(prepped, x)
    jax.block_until_ready((logits, y))

    assert logits.shape == (batch, n_classes), logits.shape
    assert y.shape == (batch, 1), y.shape

    ref_logits, ref_y = reference_forward(params, x)
    assert bool(jnp.allclose(logits, ref_logits, rtol=2e-2, atol=2e-3)), "logits mismatch"
    assert bool(jnp.allclose(y, ref_y, rtol=2e-2, atol=2e-3)), "discriminator mismatch"

    print("KERNEL_OK")
</pallas_src>

<mosaic_0001>
module attributes {stable_mosaic.version = 11 : i64} {
  func.func @_hybjim_fused_kernel(%arg0: i32, %arg1: memref<8x416xbf16, #tpu.memory_space<vmem>>, %arg2: memref<416x624xbf16, #tpu.memory_space<vmem>>, %arg3: memref<624x72xbf16, #tpu.memory_space<vmem>>, %arg4: memref<72x1xbf16, #tpu.memory_space<vmem>>, %arg5: memref<1x1xf32, #tpu.memory_space<vmem>>, %arg6: memref<72x64xbf16, #tpu.memory_space<vmem>>, %arg7: memref<1x64xf32, #tpu.memory_space<vmem>>, %arg8: memref<64x32xbf16, #tpu.memory_space<vmem>>, %arg9: memref<1x32xf32, #tpu.memory_space<vmem>>, %arg10: memref<32x4xbf16, #tpu.memory_space<vmem>>, %arg11: memref<1x4xf32, #tpu.memory_space<vmem>>, %arg12: memref<8x5xf32, #tpu.memory_space<vmem>>) attributes {dimension_semantics = [#tpu.dimension_semantics<parallel>], iteration_bounds = array<i64: 2>, scalar_prefetch = 0 : i64, scratch_operands = 0 : i64, tpu.core_type = #tpu.core_type<tc>, window_params = [{transform_indices = @transform_0, window_bounds = array<i64: 8, 416>}, {pipeline_mode = #tpu.pipeline_mode<synchronous>, transform_indices = @transform_1, window_bounds = array<i64: 416, 624>}, {pipeline_mode = #tpu.pipeline_mode<synchronous>, transform_indices = @transform_2, window_bounds = array<i64: 624, 72>}, {pipeline_mode = #tpu.pipeline_mode<synchronous>, transform_indices = @transform_3, window_bounds = array<i64: 72, 1>}, {pipeline_mode = #tpu.pipeline_mode<synchronous>, transform_indices = @transform_4, window_bounds = array<i64: 1, 1>}, {pipeline_mode = #tpu.pipeline_mode<synchronous>, transform_indices = @transform_5, window_bounds = array<i64: 72, 64>}, {pipeline_mode = #tpu.pipeline_mode<synchronous>, transform_indices = @transform_6, window_bounds = array<i64: 1, 64>}, {pipeline_mode = #tpu.pipeline_mode<synchronous>, transform_indices = @transform_7, window_bounds = array<i64: 64, 32>}, {pipeline_mode = #tpu.pipeline_mode<synchronous>, transform_indices = @transform_8, window_bounds = array<i64: 1, 32>}, {pipeline_mode = #tpu.pipeline_mode<synchronous>, transform_indices = @transform_9, window_bounds = array<i64: 32, 4>}, {pipeline_mode = #tpu.pipeline_mode<synchronous>, transform_indices = @transform_10, window_bounds = array<i64: 1, 4>}, {transform_indices = @transform_11, window_bounds = array<i64: 8, 5>}]} {
    %c0 = arith.constant 0 : index
    %c0_0 = arith.constant 0 : index
    %0 = vector.load %arg1[%c0, %c0_0] : memref<8x416xbf16, #tpu.memory_space<vmem>>, vector<8x416xbf16>
    %c0_1 = arith.constant 0 : index
    %c0_2 = arith.constant 0 : index
    %1 = vector.load %arg2[%c0_1, %c0_2] : memref<416x624xbf16, #tpu.memory_space<vmem>>, vector<416x624xbf16>
    %cst = arith.constant dense<0.000000e+00> : vector<8x624xf32>
    %2 = tpu.matmul %0, %1, %cst {dimension_numbers = #tpu.dot_dimension_numbers<[1], [0], [0], [1], [0, 0, 1, 1], [], []>} : vector<8x416xbf16>, vector<416x624xbf16>, vector<8x624xf32> -> vector<8x624xf32>
    %cst_3 = arith.constant 0.000000e+00 : f32
    %3 = vector.broadcast %cst_3 : f32 to vector<8x624xf32>
    %4 = arith.maximumf %2, %3 : vector<8x624xf32>
    %5 = arith.truncf %4 : vector<8x624xf32> to vector<8x624xbf16>
    %c0_4 = arith.constant 0 : index
    %c0_5 = arith.constant 0 : index
    %6 = vector.load %arg3[%c0_4, %c0_5] : memref<624x72xbf16, #tpu.memory_space<vmem>>, vector<624x72xbf16>
    %cst_6 = arith.constant dense<0.000000e+00> : vector<8x72xf32>
    %7 = tpu.matmul %5, %6, %cst_6 {dimension_numbers = #tpu.dot_dimension_numbers<[1], [0], [0], [1], [0, 0, 1, 1], [], []>} : vector<8x624xbf16>, vector<624x72xbf16>, vector<8x72xf32> -> vector<8x72xf32>
    %cst_7 = arith.constant 0.000000e+00 : f32
    %8 = vector.broadcast %cst_7 : f32 to vector<8x72xf32>
    %9 = arith.maximumf %7, %8 : vector<8x72xf32>
    %10 = arith.truncf %9 : vector<8x72xf32> to vector<8x72xbf16>
    %c0_8 = arith.constant 0 : index
    %c0_9 = arith.constant 0 : index
    %11 = vector.load %arg4[%c0_8, %c0_9] : memref<72x1xbf16, #tpu.memory_space<vmem>>, vector<72x1xbf16>
    %cst_10 = arith.constant dense<0.000000e+00> : vector<8x1xf32>
    %12 = tpu.matmul %10, %11, %cst_10 {dimension_numbers = #tpu.dot_dimension_numbers<[1], [0], [0], [1], [0, 0, 1, 1], [], []>} : vector<8x72xbf16>, vector<72x1xbf16>, vector<8x1xf32> -> vector<8x1xf32>
    %c0_11 = arith.constant 0 : index
    %c0_12 = arith.constant 0 : index
    %13 = vector.load %arg5[%c0_11, %c0_12] : memref<1x1xf32, #tpu.memory_space<vmem>>, vector<1x1xf32>
    %14 = vector.broadcast %13 : vector<1x1xf32> to vector<8x1xf32>
    %15 = arith.addf %12, %14 : vector<8x1xf32>
    %cst_13 = arith.constant 0.000000e+00 : f32
    %16 = vector.broadcast %cst_13 : f32 to vector<8x1xf32>
    %17 = arith.subf %16, %15 : vector<8x1xf32>
    %18 = math.exp %17 : vector<8x1xf32>
    %cst_14 = arith.constant 1.000000e+00 : f32
    %19 = vector.broadcast %cst_14 : f32 to vector<8x1xf32>
    %20 = arith.addf %19, %18 : vector<8x1xf32>
    %cst_15 = arith.constant 1.000000e+00 : f32
    %21 = vector.broadcast %cst_15 : f32 to vector<8x1xf32>
    %22 = arith.divf %21, %20 : vector<8x1xf32>
    %c0_16 = arith.constant 0 : index
    %c0_17 = arith.constant 0 : index
    %23 = vector.load %arg6[%c0_16, %c0_17] : memref<72x64xbf16, #tpu.memory_space<vmem>>, vector<72x64xbf16>
    %cst_18 = arith.constant dense<0.000000e+00> : vector<8x64xf32>
    %24 = tpu.matmul %10, %23, %cst_18 {dimension_numbers = #tpu.dot_dimension_numbers<[1], [0], [0], [1], [0, 0, 1, 1], [], []>} : vector<8x72xbf16>, vector<72x64xbf16>, vector<8x64xf32> -> vector<8x64xf32>
    %c0_19 = arith.constant 0 : index
    %c0_20 = arith.constant 0 : index
    %25 = vector.load %arg7[%c0_19, %c0_20] : memref<1x64xf32, #tpu.memory_space<vmem>>, vector<1x64xf32>
    %26 = vector.broadcast %25 : vector<1x64xf32> to vector<8x64xf32>
    %27 = arith.addf %24, %26 : vector<8x64xf32>
    %cst_21 = arith.constant 0.000000e+00 : f32
    %28 = vector.broadcast %cst_21 : f32 to vector<8x64xf32>
    %29 = arith.maximumf %27, %28 : vector<8x64xf32>
    %30 = arith.truncf %29 : vector<8x64xf32> to vector<8x64xbf16>
    %c0_22 = arith.constant 0 : index
    %c0_23 = arith.constant 0 : index
    %31 = vector.load %arg8[%c0_22, %c0_23] : memref<64x32xbf16, #tpu.memory_space<vmem>>, vector<64x32xbf16>
    %cst_24 = arith.constant dense<0.000000e+00> : vector<8x32xf32>
    %32 = tpu.matmul %30, %31, %cst_24 {dimension_numbers = #tpu.dot_dimension_numbers<[1], [0], [0], [1], [0, 0, 1, 1], [], []>} : vector<8x64xbf16>, vector<64x32xbf16>, vector<8x32xf32> -> vector<8x32xf32>
    %c0_25 = arith.constant 0 : index
    %c0_26 = arith.constant 0 : index
    %33 = vector.load %arg9[%c0_25, %c0_26] : memref<1x32xf32, #tpu.memory_space<vmem>>, vector<1x32xf32>
    %34 = vector.broadcast %33 : vector<1x32xf32> to vector<8x32xf32>
    %35 = arith.addf %32, %34 : vector<8x32xf32>
    %cst_27 = arith.constant 0.000000e+00 : f32
    %36 = vector.broadcast %cst_27 : f32 to vector<8x32xf32>
    %37 = arith.maximumf %35, %36 : vector<8x32xf32>
    %38 = arith.truncf %37 : vector<8x32xf32> to vector<8x32xbf16>
    %c0_28 = arith.constant 0 : index
    %c0_29 = arith.constant 0 : index
    %39 = vector.load %arg10[%c0_28, %c0_29] : memref<32x4xbf16, #tpu.memory_space<vmem>>, vector<32x4xbf16>
    %cst_30 = arith.constant dense<0.000000e+00> : vector<8x4xf32>
    %40 = tpu.matmul %38, %39, %cst_30 {dimension_numbers = #tpu.dot_dimension_numbers<[1], [0], [0], [1], [0, 0, 1, 1], [], []>} : vector<8x32xbf16>, vector<32x4xbf16>, vector<8x4xf32> -> vector<8x4xf32>
    %c0_31 = arith.constant 0 : index
    %c0_32 = arith.constant 0 : index
    %41 = vector.load %arg11[%c0_31, %c0_32] : memref<1x4xf32, #tpu.memory_space<vmem>>, vector<1x4xf32>
    %42 = vector.broadcast %41 : vector<1x4xf32> to vector<8x4xf32>
    %43 = arith.addf %40, %42 : vector<8x4xf32>
    %c0_33 = arith.constant 0 : index
    %c0_34 = arith.constant 0 : index
    %44 = vector.load %arg12[%c0_33, %c0_34] : memref<8x5xf32, #tpu.memory_space<vmem>>, vector<8x4xf32>
    tpu.vector_store %arg12[%c0_33, %c0_34], %43 {strides = array<i32>} : memref<8x5xf32, #tpu.memory_space<vmem>>, vector<8x4xf32>,
    %c0_35 = arith.constant 0 : index
    %c4 = arith.constant 4 : index
    %45 = vector.load %arg12[%c0_35, %c4] : memref<8x5xf32, #tpu.memory_space<vmem>>, vector<8x1xf32>
    tpu.vector_store %arg12[%c0_35, %c4], %22 {strides = array<i32>} : memref<8x5xf32, #tpu.memory_space<vmem>>, vector<8x1xf32>,
    return
  }
  func.func @transform_0(%arg0: i32) -> (i32, i32) {
    %c0_i32 = arith.constant 0 : i32
    %c0_i32_0 = arith.constant 0 : i32
    return %arg0, %c0_i32 : i32, i32
  }
  func.func @transform_1(%arg0: i32) -> (i32, i32) {
    %c0_i32 = arith.constant 0 : i32
    %c0_i32_0 = arith.constant 0 : i32
    %c0_i32_1 = arith.constant 0 : i32
    return %c0_i32, %c0_i32_0 : i32, i32
  }
  func.func @transform_2(%arg0: i32) -> (i32, i32) {
    %c0_i32 = arith.constant 0 : i32
    %c0_i32_0 = arith.constant 0 : i32
    %c0_i32_1 = arith.constant 0 : i32
    return %c0_i32, %c0_i32_0 : i32, i32
  }
  func.func @transform_3(%arg0: i32) -> (i32, i32) {
    %c0_i32 = arith.constant 0 : i32
    %c0_i32_0 = arith.constant 0 : i32
    %c0_i32_1 = arith.constant 0 : i32
    return %c0_i32, %c0_i32_0 : i32, i32
  }
  func.func @transform_4(%arg0: i32) -> (i32, i32) {
    %c0_i32 = arith.constant 0 : i32
    %c0_i32_0 = arith.constant 0 : i32
    %c0_i32_1 = arith.constant 0 : i32
    return %c0_i32, %c0_i32_0 : i32, i32
  }
  func.func @transform_5(%arg0: i32) -> (i32, i32) {
    %c0_i32 = arith.constant 0 : i32
    %c0_i32_0 = arith.constant 0 : i32
    %c0_i32_1 = arith.constant 0 : i32
    return %c0_i32, %c0_i32_0 : i32, i32
  }
  func.func @transform_6(%arg0: i32) -> (i32, i32) {
    %c0_i32 = arith.constant 0 : i32
    %c0_i32_0 = arith.constant 0 : i32
    %c0_i32_1 = arith.constant 0 : i32
    return %c0_i32, %c0_i32_0 : i32, i32
  }
  func.func @transform_7(%arg0: i32) -> (i32, i32) {
    %c0_i32 = arith.constant 0 : i32
    %c0_i32_0 = arith.constant 0 : i32
    %c0_i32_1 = arith.constant 0 : i32
    return %c0_i32, %c0_i32_0 : i32, i32
  }
  func.func @transform_8(%arg0: i32) -> (i32, i32) {
    %c0_i32 = arith.constant 0 : i32
    %c0_i32_0 = arith.constant 0 : i32
    %c0_i32_1 = arith.constant 0 : i32
    return %c0_i32, %c0_i32_0 : i32, i32
  }
  func.func @transform_9(%arg0: i32) -> (i32, i32) {
    %c0_i32 = arith.constant 0 : i32
    %c0_i32_0 = arith.constant 0 : i32
    %c0_i32_1 = arith.constant 0 : i32
    return %c0_i32, %c0_i32_0 : i32, i32
  }
  func.func @transform_10(%arg0: i32) -> (i32, i32) {
    %c0_i32 = arith.constant 0 : i32
    %c0_i32_0 = arith.constant 0 : i32
    %c0_i32_1 = arith.constant 0 : i32
    return %c0_i32, %c0_i32_0 : i32, i32
  }
  func.func @transform_11(%arg0: i32) -> (i32, i32) {
    %c0_i32 = arith.constant 0 : i32
    %c0_i32_0 = arith.constant 0 : i32
    return %arg0, %c0_i32 : i32, i32
  }
}

</mosaic_0001>

<llo_original>
// kernel: hybjim_forward.1
$region0: #{hybjim_forward.1}
  #allocation0 [shape = 'u32[]', space=smem, size = 0x4, offset = 0x4, fixed_abs, tag = 'smem constant byte address 0x4 - core index']
  #allocation1 [shape = 'u32[72,128]{1,0:T(1,128)}', space=vmem, size = 0x9000, scoped, tag = 'internal scratch']
  #allocation2 [shape = 'f32[1,1]{1,0:T(1,128)S(1)}', space=vmem, size = 0x200, scoped, tag = 'scoped memory for hybjim_forward.1']
  %s0 = inlined_call_operand.vmem [shape: bf16[16,416], index: 0, kind: input, shape index: {}]
  %s1 = inlined_call_operand.hbm [shape: bf16[416,624], index: 1, kind: input, shape index: {}]
  %s2 = inlined_call_operand.vmem [shape: bf16[624,72], index: 2, kind: input, shape index: {}]
  %s3 = inlined_call_operand.vmem [shape: bf16[72,1], index: 3, kind: input, shape index: {}]
  %s4 = inlined_call_operand.<no memory space> [shape: f32[1,1], index: 4, kind: input, shape index: {}]
  %s5 = inlined_call_operand.vmem [shape: bf16[72,64], index: 5, kind: input, shape index: {}]
  %s6 = inlined_call_operand.vmem [shape: f32[1,64], index: 6, kind: input, shape index: {}]
  %s7 = inlined_call_operand.vmem [shape: bf16[64,32], index: 7, kind: input, shape index: {}]
  %s8 = inlined_call_operand.vmem [shape: f32[1,32], index: 8, kind: input, shape index: {}]
  %s9 = inlined_call_operand.vmem [shape: bf16[32,4], index: 9, kind: input, shape index: {}]
  %s10 = inlined_call_operand.vmem [shape: f32[1,4], index: 10, kind: input, shape index: {}]
  %s11 = inlined_call_operand.vmem [shape: f32[16,5], index: 11, kind: output, shape index: {}]
  %s12 = sld [smem:[#allocation0]]
  $region81: #{hybjim_forward.1} parent=0
    _
  %s14 = ssub.s32 1, %s12
  %s15 = scalar_select 0, %s14, %s12
  %v16 = vstv %s4
  %17 = vst [vmem:[#allocation2] sm:$0x1] %v16
  $region1: #{hybjim_forward.1} parent=0
    #allocation3 [shape = 'u8[532480]{0}', space=vmem, size = 0x82000, scoped, tag = 'input window, operand 1, single buffered']
    #allocation4 [shape = 's32[2]{0}', space=sflag, size = 0x8, scoped, tag = 'scoped memory for hybjim_forward.1']
    %18 = vsyncpa [#allocation4], 0
    loop: start=0, step=1, limit=4
    $region2: #{hybjim_forward.1} parent=1 // loop_pre_header
      _
    $region3: #{hybjim_forward.1} parent=1 // loop_header
      %s20 = sphi 0, %s24
      %p21 = scmp.ge.s32.totalorder %s20, 4
      %s30 = sphi 0, %s32
      %s33 = sphi 0, %s30
      %s34 = sphi 0, %s33
      %s50 = sphi 0, %s34
      %s54 = sphi 0, %s54
      %s56 = sphi 0, %s54
      %s57 = sphi 0, %s56
      %s71 = sphi 0, %s57
      %s75 = sphi 0, %s75
      %s77 = sphi 0, %s75
      %s78 = sphi 0, %s77
      %s92 = sphi 0, %s78
      %s96 = sphi 0, %s96
      %s98 = sphi 0, %s96
      %s99 = sphi 0, %s98
      %s113 = sphi 0, %s99
      %s117 = sphi 0, %s117
      %s119 = sphi 0, %s117
      %s120 = sphi 0, %s119
      %s134 = sphi 0, %s120
      %s138 = sphi 0, %s138
      %s140 = sphi 0, %s138
      %s141 = sphi 0, %s140
      %s155 = sphi 0, %s141
      %s159 = sphi 0, %s159
      %s161 = sphi 0, %s159
      %s162 = sphi 0, %s161
      %s176 = sphi 0, %s162
      %s180 = sphi 0, %s180
      %s182 = sphi 0, %s180
      %s183 = sphi 0, %s182
      %s197 = sphi 0, %s183
      %s201 = sphi 0, %s201
      %s203 = sphi 0, %s201
      %s204 = sphi 0, %s203
      %s218 = sphi 0, %s204
      %s222 = sphi 0, %s222
      %s224 = sphi 0, %s222
      %s225 = sphi 0, %s224
      %s239 = sphi 0, %s225
      %s243 = sphi 0, %s243
      %s245 = sphi 0, %s243
      %s246 = sphi 0, %s245
      %s260 = sphi 0, %s246
      %s266 = sphi 0, %s268
      %s269 = sphi 0, %s266
      %s270 = sphi 0, %s269
      %s286 = sphi 0, %s270
    $region4: #{hybjim_forward.1} parent=1 // loop_header_branch
      %23 = sbr.rel (%p21) target = $region8
    $region5: #{hybjim_forward.1} parent=1 // loop_body
      %s25 = ssub.s32 %s20, 1
      %s26 = ssub.s32 %s20, 2
      %s27 = sadd.s32 %s20, 1
      %s28 = ssub.s32 %s20, %s27
      %p29 = scmp.eq.s32.totalorder %s28, 0
      %s31 = sadd.s32 %s30, 1
      %s32 = scalar_select %p29, %s30, %s31
      %p35 = pneg %p29
      %p36 = scmp.eq.s32.totalorder %s20, 1
      %p37 = por %p35, %p36
      %p38 = scmp.ne.s32.totalorder %s30, %s33
      %p39 = scmp.eq.s32.totalorder %s20, 0
      %p40 = por %p38, %p39
      %p41 = scmp.ne.s32.totalorder %s30, %s33
      %p42 = scmp.eq.s32.totalorder %s25, 1
      %p43 = por %p41, %p42
      %p44 = scmp.ne.s32.totalorder %s33, %s34
      %p45 = scmp.eq.s32.totalorder %s25, 0
      %p46 = por %p44, %p45
      %p47 = scmp.ne.s32.totalorder %s33, %s34
      %p48 = scmp.eq.s32.totalorder %s26, 1
      %p49 = por %p47, %p48
      %p51 = scmp.ne.s32.totalorder %s34, %s50
      %p52 = scmp.eq.s32.totalorder %s26, 0
      %p53 = por %p51, %p52
      %s55 = sadd.s32 %s54, 1
      %p58 = scmp.eq.s32.totalorder %s20, 1
      %p59 = scmp.ne.s32.totalorder %s54, %s56
      %p60 = scmp.eq.s32.totalorder %s20, 0
      %p61 = por %p59, %p60
      %p62 = scmp.ne.s32.totalorder %s54, %s56
      %p63 = scmp.eq.s32.totalorder %s25, 1
      %p64 = por %p62, %p63
      %p65 = scmp.ne.s32.totalorder %s56, %s57
      %p66 = scmp.eq.s32.totalorder %s25, 0
      %p67 = por %p65, %p66
      %p68 = scmp.ne.s32.totalorder %s56, %s57
      %p69 = scmp.eq.s32.totalorder %s26, 1
      %p70 = por %p68, %p69
      %p72 = scmp.ne.s32.totalorder %s57, %s71
      %p73 = scmp.eq.s32.totalorder %s26, 0
      %p74 = por %p72, %p73
      %s76 = sadd.s32 %s75, 1
      %p79 = scmp.eq.s32.totalorder %s20, 1
      %p80 = scmp.ne.s32.totalorder %s75, %s77
      %p81 = scmp.eq.s32.totalorder %s20, 0
      %p82 = por %p80, %p81
      %p83 = scmp.ne.s32.totalorder %s75, %s77
      %p84 = scmp.eq.s32.totalorder %s25, 1
      %p85 = por %p83, %p84
      %p86 = scmp.ne.s32.totalorder %s77, %s78
      %p87 = scmp.eq.s32.totalorder %s25, 0
      %p88 = por %p86, %p87
      %p89 = scmp.ne.s32.totalorder %s77, %s78
      %p90 = scmp.eq.s32.totalorder %s26, 1
      %p91 = por %p89, %p90
      %p93 = scmp.ne.s32.totalorder %s78, %s92
      %p94 = scmp.eq.s32.totalorder %s26, 0
      %p95 = por %p93, %p94
      %s97 = sadd.s32 %s96, 1
      %p100 = scmp.eq.s32.totalorder %s20, 1
      %p101 = scmp.ne.s32.totalorder %s96, %s98
      %p102 = scmp.eq.s32.totalorder %s20, 0
      %p103 = por %p101, %p102
      %p104 = scmp.ne.s32.totalorder %s96, %s98
      %p105 = scmp.eq.s32.totalorder %s25, 1
      %p106 = por %p104, %p105
      %p107 = scmp.ne.s32.totalorder %s98, %s99
      %p108 = scmp.eq.s32.totalorder %s25, 0
      %p109 = por %p107, %p108
      %p110 = scmp.ne.s32.totalorder %s98, %s99
      %p111 = scmp.eq.s32.totalorder %s26, 1
      %p112 = por %p110, %p111
      %p114 = scmp.ne.s32.totalorder %s99, %s113
      %p115 = scmp.eq.s32.totalorder %s26, 0
      %p116 = por %p114, %p115
      %s118 = sadd.s32 %s117, 1
      %p121 = scmp.eq.s32.totalorder %s20, 1
      %p122 = scmp.ne.s32.totalorder %s117, %s119
      %p123 = scmp.eq.s32.totalorder %s20, 0
      %p124 = por %p122, %p123
      %p125 = scmp.ne.s32.totalorder %s117, %s119
      %p126 = scmp.eq.s32.totalorder %s25, 1
      %p127 = por %p125, %p126
      %p128 = scmp.ne.s32.totalorder %s119, %s120
      %p129 = scmp.eq.s32.totalorder %s25, 0
      %p130 = por %p128, %p129
      %p131 = scmp.ne.s32.totalorder %s119, %s120
      %p132 = scmp.eq.s32.totalorder %s26, 1
      %p133 = por %p131, %p132
      %p135 = scmp.ne.s32.totalorder %s120, %s134
      %p136 = scmp.eq.s32.totalorder %s26, 0
      %p137 = por %p135, %p136
      %s139 = sadd.s32 %s138, 1
      %p142 = scmp.eq.s32.totalorder %s20, 1
      %p143 = scmp.ne.s32.totalorder %s138, %s140
      %p144 = scmp.eq.s32.totalorder %s20, 0
      %p145 = por %p143, %p144
      %p146 = scmp.ne.s32.totalorder %s138, %s140
      %p147 = scmp.eq.s32.totalorder %s25, 1
      %p148 = por %p146, %p147
      %p149 = scmp.ne.s32.totalorder %s140, %s141
      %p150 = scmp.eq.s32.totalorder %s25, 0
      %p151 = por %p149, %p150
      %p152 = scmp.ne.s32.totalorder %s140, %s141
      %p153 = scmp.eq.s32.totalorder %s26, 1
      %p154 = por %p152, %p153
      %p156 = scmp.ne.s32.totalorder %s141, %s155
      %p157 = scmp.eq.s32.totalorder %s26, 0
      %p158 = por %p156, %p157
      %s160 = sadd.s32 %s159, 1
      %p163 = scmp.eq.s32.totalorder %s20, 1
      %p164 = scmp.ne.s32.totalorder %s159, %s161
      %p165 = scmp.eq.s32.totalorder %s20, 0
      %p166 = por %p164, %p165
      %p167 = scmp.ne.s32.totalorder %s159, %s161
      %p168 = scmp.eq.s32.totalorder %s25, 1
      %p169 = por %p167, %p168
      %p170 = scmp.ne.s32.totalorder %s161, %s162
      %p171 = scmp.eq.s32.totalorder %s25, 0
      %p172 = por %p170, %p171
      %p173 = scmp.ne.s32.totalorder %s161, %s162
      %p174 = scmp.eq.s32.totalorder %s26, 1
      %p175 = por %p173, %p174
      %p177 = scmp.ne.s32.totalorder %s162, %s176
      %p178 = scmp.eq.s32.totalorder %s26, 0
      %p179 = por %p177, %p178
      %s181 = sadd.s32 %s180, 1
      %p184 = scmp.eq.s32.totalorder %s20, 1
      %p185 = scmp.ne.s32.totalorder %s180, %s182
      %p186 = scmp.eq.s32.totalorder %s20, 0
      %p187 = por %p185, %p186
      %p188 = scmp.ne.s32.totalorder %s180, %s182
      %p189 = scmp.eq.s32.totalorder %s25, 1
      %p190 = por %p188, %p189
      %p191 = scmp.ne.s32.totalorder %s182, %s183
      %p192 = scmp.eq.s32.totalorder %s25, 0
      %p193 = por %p191, %p192
      %p194 = scmp.ne.s32.totalorder %s182, %s183
      %p195 = scmp.eq.s32.totalorder %s26, 1
      %p196 = por %p194, %p195
      %p198 = scmp.ne.s32.totalorder %s183, %s197
      %p199 = scmp.eq.s32.totalorder %s26, 0
      %p200 = por %p198, %p199
      %s202 = sadd.s32 %s201, 1
      %p205 = scmp.eq.s32.totalorder %s20, 1
      %p206 = scmp.ne.s32.totalorder %s201, %s203
      %p207 = scmp.eq.s32.totalorder %s20, 0
      %p208 = por %p206, %p207
      %p209 = scmp.ne.s32.totalorder %s201, %s203
      %p210 = scmp.eq.s32.totalorder %s25, 1
      %p211 = por %p209, %p210
      %p212 = scmp.ne.s32.totalorder %s203, %s204
      %p213 = scmp.eq.s32.totalorder %s25, 0
      %p214 = por %p212, %p213
      %p215 = scmp.ne.s32.totalorder %s203, %s204
      %p216 = scmp.eq.s32.totalorder %s26, 1
      %p217 = por %p215, %p216
      %p219 = scmp.ne.s32.totalorder %s204, %s218
      %p220 = scmp.eq.s32.totalorder %s26, 0
      %p221 = por %p219, %p220
      %s223 = sadd.s32 %s222, 1
      %p226 = scmp.eq.s32.totalorder %s20, 1
      %p227 = scmp.ne.s32.totalorder %s222, %s224
      %p228 = scmp.eq.s32.totalorder %s20, 0
      %p229 = por %p227, %p228
      %p230 = scmp.ne.s32.totalorder %s222, %s224
      %p231 = scmp.eq.s32.totalorder %s25, 1
      %p232 = por %p230, %p231
      %p233 = scmp.ne.s32.totalorder %s224, %s225
      %p234 = scmp.eq.s32.totalorder %s25, 0
      %p235 = por %p233, %p234
      %p236 = scmp.ne.s32.totalorder %s224, %s225
      %p237 = scmp.eq.s32.totalorder %s26, 1
      %p238 = por %p236, %p237
      %p240 = scmp.ne.s32.totalorder %s225, %s239
      %p241 = scmp.eq.s32.totalorder %s26, 0
      %p242 = por %p240, %p241
      %s244 = sadd.s32 %s243, 1
      %p247 = scmp.eq.s32.totalorder %s20, 1
      %p248 = scmp.ne.s32.totalorder %s243, %s245
      %p249 = scmp.eq.s32.totalorder %s20, 0
      %p250 = por %p248, %p249
      %p251 = scmp.ne.s32.totalorder %s243, %s245
      %p252 = scmp.eq.s32.totalorder %s25, 1
      %p253 = por %p251, %p252
      %p254 = scmp.ne.s32.totalorder %s245, %s246
      %p255 = scmp.eq.s32.totalorder %s25, 0
      %p256 = por %p254, %p255
      %p257 = scmp.ne.s32.totalorder %s245, %s246
      %p258 = scmp.eq.s32.totalorder %s26, 1
      %p259 = por %p257, %p258
      %p261 = scmp.ne.s32.totalorder %s246, %s260
      %p262 = scmp.eq.s32.totalorder %s26, 0
      %p263 = por %p261, %p262
      %s264 = ssub.s32 %s20, %s27
      %p265 = scmp.eq.s32.totalorder %s264, 0
      %s267 = sadd.s32 %s266, 1
      %s268 = scalar_select %p265, %s266, %s267
      %p271 = pneg %p265
      %p272 = scmp.eq.s32.totalorder %s20, 1
      %p273 = por %p271, %p272
      %p274 = scmp.ne.s32.totalorder %s266, %s269
      %p275 = scmp.eq.s32.totalorder %s20, 0
      %p276 = por %p274, %p275
      %p277 = scmp.ne.s32.totalorder %s266, %s269
      %p278 = scmp.eq.s32.totalorder %s25, 1
      %p279 = por %p277, %p278
      %p280 = scmp.ne.s32.totalorder %s269, %s270
      %p281 = scmp.eq.s32.totalorder %s25, 0
      %p282 = por %p280, %p281
      %p283 = scmp.ne.s32.totalorder %s269, %s270
      %p284 = scmp.eq.s32.totalorder %s26, 1
      %p285 = por %p283, %p284
      %p287 = scmp.ne.s32.totalorder %s270, %s286
      %p288 = scmp.eq.s32.totalorder %s26, 0
      %p289 = por %p287, %p288
      %p290 = scmp.le.s32.totalorder 1, %s20
      %p291 = scmp.lt.s32.totalorder %s20, 3
      %p292 = pnand %p290, %p291
      %p293 = pneg %p292
      // Predicated region
      $region9: #{hybjim_forward.1} parent=5 // pred_check
        _
      $region10: #{hybjim_forward.1} parent=5 // pred_check_branch
        %295 = sbr.rel (%p292) target = $region12
      $region11: #{hybjim_forward.1} parent=5 // pred_region
        %s296 = ssub.s32 %s20, 1
        // Predicated region
        $region13: #{hybjim_forward.1} parent=11 // pred_check
          %p297 = pneg %p67
        $region14: #{hybjim_forward.1} parent=11 // pred_check_branch
          %299 = sbr.rel (%p297) target = $region16
        $region15: #{hybjim_forward.1} parent=11 // pred_region
          %301 = vsyncadd [#allocation4], 0
          %s302 = sshll.u32 %s1, 4
          %s303 = int_to_ptr.hbm [resolvable:$true] %s302
          %s304 = sshll.u32 [#allocation3], 4
          %s305 = int_to_ptr.vmem [resolvable:$true] %s304
          %310 = dma.hbm_to_vmem [thread:$0]  %s303, 16640, %s305, [#allocation4], 320, 320, 20
        $region16: #{hybjim_forward.1} parent=11 // pred_fallthru
          _
        // Predicated region
        $region17: #{hybjim_forward.1} parent=11 // pred_check
          %p311 = pneg %p88
        $region18: #{hybjim_forward.1} parent=11 // pred_check_branch
          %313 = sbr.rel (%p311) target = $region20
        $region19: #{hybjim_forward.1} parent=11 // pred_region
          _
        $region20: #{hybjim_forward.1} parent=11 // pred_fallthru
          _
        // Predicated region
        $region21: #{hybjim_forward.1} parent=11 // pred_check
          %p314 = pneg %p109
        $region22: #{hybjim_forward.1} parent=11 // pred_check_branch
          %316 = sbr.rel (%p314) target = $region24
        $region23: #{hybjim_forward.1} parent=11 // pred_region
          _
        $region24: #{hybjim_forward.1} parent=11 // pred_fallthru
          _
        // Predicated region
        $region25: #{hybjim_forward.1} parent=11 // pred_check
          %p317 = pneg %p130
        $region26: #{hybjim_forward.1} parent=11 // pred_check_branch
          %319 = sbr.rel (%p317) target = $region28
        $region27: #{hybjim_forward.1} parent=11 // pred_region
          _
        $region28: #{hybjim_forward.1} parent=11 // pred_fallthru
          _
        // Predicated region
        $region29: #{hybjim_forward.1} parent=11 // pred_check
          %p320 = pneg %p151
        $region30: #{hybjim_forward.1} parent=11 // pred_check_branch
          %322 = sbr.rel (%p320) target = $region32
        $region31: #{hybjim_forward.1} parent=11 // pred_region
          _
        $region32: #{hybjim_forward.1} parent=11 // pred_fallthru
          _
        // Predicated region
        $region33: #{hybjim_forward.1} parent=11 // pred_check
          %p323 = pneg %p172
        $region34: #{hybjim_forward.1} parent=11 // pred_check_branch
          %325 = sbr.rel (%p323) target = $region36
        $region35: #{hybjim_forward.1} parent=11 // pred_region
          _
        $region36: #{hybjim_forward.1} parent=11 // pred_fallthru
          _
        // Predicated region
        $region37: #{hybjim_forward.1} parent=11 // pred_check
          %p326 = pneg %p193
        $region38: #{hybjim_forward.1} parent=11 // pred_check_branch
          %328 = sbr.rel (%p326) target = $region40
        $region39: #{hybjim_forward.1} parent=11 // pred_region
          _
        $region40: #{hybjim_forward.1} parent=11 // pred_fallthru
          _
        // Predicated region
        $region41: #{hybjim_forward.1} parent=11 // pred_check
          %p329 = pneg %p214
        $region42: #{hybjim_forward.1} parent=11 // pred_check_branch
          %331 = sbr.rel (%p329) target = $region44
        $region43: #{hybjim_forward.1} parent=11 // pred_region
          _
        $region44: #{hybjim_forward.1} parent=11 // pred_fallthru
          _
        // Predicated region
        $region45: #{hybjim_forward.1} parent=11 // pred_check
          %p332 = pneg %p235
        $region46: #{hybjim_forward.1} parent=11 // pred_check_branch
          %334 = sbr.rel (%p332) target = $region48
        $region47: #{hybjim_forward.1} parent=11 // pred_region
          _
        $region48: #{hybjim_forward.1} parent=11 // pred_fallthru
          _
        // Predicated region
        $region49: #{hybjim_forward.1} parent=11 // pred_check
          %p335 = pneg %p256
        $region50: #{hybjim_forward.1} parent=11 // pred_check_branch
          %337 = sbr.rel (%p335) target = $region52
        $region51: #{hybjim_forward.1} parent=11 // pred_region
          _
        $region52: #{hybjim_forward.1} parent=11 // pred_fallthru
          _
      $region12: #{hybjim_forward.1} parent=5 // pred_fallthru
        _
      %p338 = scmp.lt.s32.totalorder %s20, 2
      // Predicated region
      $region53: #{hybjim_forward.1} parent=5 // pred_check
        %p339 = pneg %p338
      $region54: #{hybjim_forward.1} parent=5 // pred_check_branch
        %341 = sbr.rel (%p339) target = $region56
      $region55: #{hybjim_forward.1} parent=5 // pred_region
        // Predicated region
        $region57: #{hybjim_forward.1} parent=55 // pred_check
          %p342 = pneg %p40
        $region58: #{hybjim_forward.1} parent=55 // pred_check_branch
          %344 = sbr.rel (%p342) target = $region60
        $region59: #{hybjim_forward.1} parent=55 // pred_region
          %p345 = scmp.lt.s32.totalorder %s20, 1
          %s346 = scalar_select %p345, %s20, 1
          %s347 = smul.addr %s346, 4
          %s348 = smul.addr %s347, 4
          %s349 = scalar_lea.vmem %s0, %s348
        $region60: #{hybjim_forward.1} parent=55 // pred_fallthru
          _
      $region56: #{hybjim_forward.1} parent=5 // pred_fallthru
        _
      %p350 = scmp.le.s32.totalorder 1, %s20
      %p351 = scmp.lt.s32.totalorder %s20, 3
      %p352 = pnand %p350, %p351
      %p353 = pneg %p352
      // Predicated region
      $region61: #{hybjim_forward.1} parent=5 // pred_check
        _
      $region62: #{hybjim_forward.1} parent=5 // pred_check_branch
        %355 = sbr.rel (%p352) target = $region64
      $region63: #{hybjim_forward.1} parent=5 // pred_region
        %s356 = ssub.s32 %s20, 1
        // Predicated region
        $region65: #{hybjim_forward.1} parent=63 // pred_check
          %p357 = pneg %p67
        $region66: #{hybjim_forward.1} parent=63 // pred_check_branch
          %359 = sbr.rel (%p357) target = $region68
        $region67: #{hybjim_forward.1} parent=63 // pred_region
          %361 = dma.done [#allocation4], 16640
        $region68: #{hybjim_forward.1} parent=63 // pred_fallthru
          _
        %p362 = scmp.lt.s32.totalorder %s25, 1
        %s363 = scalar_select %p362, %s25, 1
        %s364 = smul.addr %s363, 4
        %s365 = smul.addr %s364, 4
        %s366 = scalar_lea.vmem %s0, %s365
        %p367 = pneg %p46
        %p368 = pneg %p43
        %p369 = pneg %p67
        %p370 = pneg %p64
        %p371 = pneg %p88
        %p372 = pneg %p85
        %p373 = pneg %p109
        %p374 = pneg %p106
        %p375 = pneg %p130
        %p376 = pneg %p127
        %p377 = pneg %p151
        %p378 = pneg %p148
        %p379 = pneg %p172
        %p380 = pneg %p169
        %p381 = pneg %p193
        %p382 = pneg %p190
        %p383 = pneg %p214
        %p384 = pneg %p211
        %p385 = pneg %p235
        %p386 = pneg %p232
        %p387 = pneg %p256
        %p388 = pneg %p253
        %p389 = pneg %p282
        %p390 = pneg %p279
        %p391 = scmp.lt.s32.totalorder %s25, 1
        %s392 = scalar_select %p391, %s25, 1
        %s393 = smul.addr %s392, 8
        %s394 = scalar_lea.vmem %s11, %s393
        %p395 = scmp.lt.s32.totalorder %s25, 1
        %s396 = scalar_select %p395, %s25, 1
        %s397 = smul.addr %s396, 4
        %s398 = smul.addr %s397, 4
        %s399 = scalar_lea.vmem %s0, %s398
        %p400 = scmp.lt.s32.totalorder %s25, 1
        %s401 = scalar_select %p400, %s25, 1
        %s402 = smul.addr %s401, 8
        %s403 = scalar_lea.vmem %s11, %s402
        %v405 = vld [vmem:[%s399] sm:$0xff]
        %v406 = vld [vmem:[%s399 + $0x8] sm:$0xff]
        %v407 = vld [vmem:[#allocation3] sm:$0xff]
        %v408 = vld [vmem:[#allocation3 + $0x8] sm:$0xff]
        %v409 = vld [vmem:[#allocation3 + $0x10] sm:$0xf]
        %v410 = vld [vmem:[#allocation3 + $0x14] sm:$0xff]
        %v411 = vld [vmem:[#allocation3 + $0x1c] sm:$0xff]
        %v412 = vld [vmem:[#allocation3 + $0x24] sm:$0xf]
        %v413 = vld [vmem:[#allocation3 + $0x28] sm:$0xff]
        %v414 = vld [vmem:[#allocation3 + $0x30] sm:$0xff]
        %v415 = vld [vmem:[#allocation3 + $0x38] sm:$0xf]
        %v416 = vld [vmem:[#allocation3 + $0x3c] sm:$0xff]
        %v417 = vld [vmem:[#allocation3 + $0x44] sm:$0xff]
        %v418 = vld [vmem:[#allocation3 + $0x4c] sm:$0xf]
        %v419 = vld [vmem:[#allocation3 + $0x50] sm:$0xff]
        %v420 = vld [vmem:[#allocation3 + $0x58] sm:$0xff]
        %v421 = vld [vmem:[#allocation3 + $0x60] sm:$0xf]
        %v422 = vld [vmem:[#allocation3 + $0x64] sm:$0xff]
        %v423 = vld [vmem:[#allocation3 + $0x6c] sm:$0xff]
        %v424 = vld [vmem:[#allocation3 + $0x74] sm:$0xf]
        %v425 = vld [vmem:[#allocation3 + $0x78] sm:$0xff]
        %v426 = vld [vmem:[#allocation3 + $0x80] sm:$0xff]
        %v427 = vld [vmem:[#allocation3 + $0x88] sm:$0xf]
        %v428 = vld [vmem:[#allocation3 + $0x8c] sm:$0xff]
        %v429 = vld [vmem:[#allocation3 + $0x94] sm:$0xff]
        %v430 = vld [vmem:[#allocation3 + $0x9c] sm:$0xf]
        %v431 = vld [vmem:[#allocation3 + $0xa0] sm:$0xff]
        %v432 = vld [vmem:[#allocation3 + $0xa8] sm:$0xff]
        %v433 = vld [vmem:[#allocation3 + $0xb0] sm:$0xf]
        %v434 = vld [vmem:[#allocation3 + $0xb4] sm:$0xff]
        %v435 = vld [vmem:[#allocation3 + $0xbc] sm:$0xff]
        %v436 = vld [vmem:[#allocation3 + $0xc4] sm:$0xf]
        %v437 = vld [vmem:[#allocation3 + $0xc8] sm:$0xff]
        %v438 = vld [vmem:[#allocation3 + $0xd0] sm:$0xff]
        %v439 = vld [vmem:[#allocation3 + $0xd8] sm:$0xf]
        %v440 = vld [vmem:[#allocation3 + $0xdc] sm:$0xff]
        %v441 = vld [vmem:[#allocation3 + $0xe4] sm:$0xff]
        %v442 = vld [vmem:[#allocation3 + $0xec] sm:$0xf]
        %v443 = vld [vmem:[#allocation3 + $0xf0] sm:$0xff]
        %v444 = vld [vmem:[#allocation3 + $0xf8] sm:$0xff]
        %v445 = vld [vmem:[#allocation3 + $0x100] sm:$0xf]
        %v446 = vld [vmem:[#allocation3 + $0x104] sm:$0xff]
        %v447 = vld [vmem:[#allocation3 + $0x10c] sm:$0xff]
        %v448 = vld [vmem:[#allocation3 + $0x114] sm:$0xf]
        %v449 = vld [vmem:[#allocation3 + $0x118] sm:$0xff]
        %v450 = vld [vmem:[#allocation3 + $0x120] sm:$0xff]
        %v451 = vld [vmem:[#allocation3 + $0x128] sm:$0xf]
        %v452 = vld [vmem:[#allocation3 + $0x12c] sm:$0xff]
        %v453 = vld [vmem:[#allocation3 + $0x134] sm:$0xff]
        %v454 = vld [vmem:[#allocation3 + $0x13c] sm:$0xf]
        %v455 = vld [vmem:[#allocation3 + $0x140] sm:$0xff]
        %v456 = vld [vmem:[#allocation3 + $0x148] sm:$0xff]
        %v457 = vld [vmem:[#allocation3 + $0x150] sm:$0xf]
        %v458 = vld [vmem:[#allocation3 + $0x154] sm:$0xff]
        %v459 = vld [vmem:[#allocation3 + $0x15c] sm:$0xff]
        %v460 = vld [vmem:[#allocation3 + $0x164] sm:$0xf]
        %v461 = vld [vmem:[#allocation3 + $0x168] sm:$0xff]
        %v462 = vld [vmem:[#allocation3 + $0x170] sm:$0xff]
        %v463 = vld [vmem:[#allocation3 + $0x178] sm:$0xf]
        %v464 = vld [vmem:[#allocation3 + $0x17c] sm:$0xff]
        %v465 = vld [vmem:[#allocation3 + $0x184] sm:$0xff]
        %v466 = vld [vmem:[#allocation3 + $0x18c] sm:$0xf]
        %v467 = vld [vmem:[#allocation3 + $0x190] sm:$0xff]
        %v468 = vld [vmem:[#allocation3 + $0x198] sm:$0xff]
        %v469 = vld [vmem:[#allocation3 + $0x1a0] sm:$0xf]
        %v470 = vld [vmem:[#allocation3 + $0x1a4] sm:$0xff]
        %v471 = vld [vmem:[#allocation3 + $0x1ac] sm:$0xff]
        %v472 = vld [vmem:[#allocation3 + $0x1b4] sm:$0xf]
        %v473 = vld [vmem:[#allocation3 + $0x1b8] sm:$0xff]
        %v474 = vld [vmem:[#allocation3 + $0x1c0] sm:$0xff]
        %v475 = vld [vmem:[#allocation3 + $0x1c8] sm:$0xf]
        %v476 = vld [vmem:[#allocation3 + $0x1cc] sm:$0xff]
        %v477 = vld [vmem:[#allocation3 + $0x1d4] sm:$0xff]
        %v478 = vld [vmem:[#allocation3 + $0x1dc] sm:$0xf]
        %v479 = vld [vmem:[#allocation3 + $0x1e0] sm:$0xff]
        %v480 = vld [vmem:[#allocation3 + $0x1e8] sm:$0xff]
        %v481 = vld [vmem:[#allocation3 + $0x1f0] sm:$0xf]
        %v482 = vld [vmem:[#allocation3 + $0x1f4] sm:$0xff]
        %v483 = vld [vmem:[#allocation3 + $0x1fc] sm:$0xff]
        %v484 = vld [vmem:[#allocation3 + $0x204] sm:$0xf]
        %v485 = vld [vmem:[#allocation3 + $0x208] sm:$0xff]
        %v486 = vld [vmem:[#allocation3 + $0x210] sm:$0xff]
        %v487 = vld [vmem:[#allocation3 + $0x218] sm:$0xf]
        %v488 = vld [vmem:[#allocation3 + $0x21c] sm:$0xff]
        %v489 = vld [vmem:[#allocation3 + $0x224] sm:$0xff]
        %v490 = vld [vmem:[#allocation3 + $0x22c] sm:$0xf]
        %v491 = vld [vmem:[#allocation3 + $0x230] sm:$0xff]
        %v492 = vld [vmem:[#allocation3 + $0x238] sm:$0xff]
        %v493 = vld [vmem:[#allocation3 + $0x240] sm:$0xf]
        %v494 = vld [vmem:[#allocation3 + $0x244] sm:$0xff]
        %v495 = vld [vmem:[#allocation3 + $0x24c] sm:$0xff]
        %v496 = vld [vmem:[#allocation3 + $0x254] sm:$0xf]
        %v497 = vld [vmem:[#allocation3 + $0x258] sm:$0xff]
        %v498 = vld [vmem:[#allocation3 + $0x260] sm:$0xff]
        %v499 = vld [vmem:[#allocation3 + $0x268] sm:$0xf]
        %v500 = vld [vmem:[#allocation3 + $0x26c] sm:$0xff]
        %v501 = vld [vmem:[#allocation3 + $0x274] sm:$0xff]
        %v502 = vld [vmem:[#allocation3 + $0x27c] sm:$0xf]
        %v503 = vld [vmem:[#allocation3 + $0x280] sm:$0xff]
        %v504 = vld [vmem:[#allocation3 + $0x288] sm:$0xff]
        %v505 = vld [vmem:[#allocation3 + $0x290] sm:$0xf]
        %v506 = vld [vmem:[#allocation3 + $0x294] sm:$0xff]
        %v507 = vld [vmem:[#allocation3 + $0x29c] sm:$0xff]
        %v508 = vld [vmem:[#allocation3 + $0x2a4] sm:$0xf]
        %v509 = vld [vmem:[#allocation3 + $0x2a8] sm:$0xff]
        %v510 = vld [vmem:[#allocation3 + $0x2b0] sm:$0xff]
        %v511 = vld [vmem:[#allocation3 + $0x2b8] sm:$0xf]
        %v512 = vld [vmem:[#allocation3 + $0x2bc] sm:$0xff]
        %v513 = vld [vmem:[#allocation3 + $0x2c4] sm:$0xff]
        %v514 = vld [vmem:[#allocation3 + $0x2cc] sm:$0xf]
        %v515 = vld [vmem:[#allocation3 + $0x2d0] sm:$0xff]
        %v516 = vld [vmem:[#allocation3 + $0x2d8] sm:$0xff]
        %v517 = vld [vmem:[#allocation3 + $0x2e0] sm:$0xf]
        %v518 = vld [vmem:[#allocation3 + $0x2e4] sm:$0xff]
        %v519 = vld [vmem:[#allocation3 + $0x2ec] sm:$0xff]
        %v520 = vld [vmem:[#allocation3 + $0x2f4] sm:$0xf]
        %v521 = vld [vmem:[#allocation3 + $0x2f8] sm:$0xff]
        %v522 = vld [vmem:[#allocation3 + $0x300] sm:$0xff]
        %v523 = vld [vmem:[#allocation3 + $0x308] sm:$0xf]
        %v524 = vld [vmem:[#allocation3 + $0x30c] sm:$0xff]
        %v525 = vld [vmem:[#allocation3 + $0x314] sm:$0xff]
        %v526 = vld [vmem:[#allocation3 + $0x31c] sm:$0xf]
        %v527 = vld [vmem:[#allocation3 + $0x320] sm:$0xff]
        %v528 = vld [vmem:[#allocation3 + $0x328] sm:$0xff]
        %v529 = vld [vmem:[#allocation3 + $0x330] sm:$0xf]
        %v530 = vld [vmem:[#allocation3 + $0x334] sm:$0xff]
        %v531 = vld [vmem:[#allocation3 + $0x33c] sm:$0xff]
        %v532 = vld [vmem:[#allocation3 + $0x344] sm:$0xf]
        %v533 = vld [vmem:[#allocation3 + $0x348] sm:$0xff]
        %v534 = vld [vmem:[#allocation3 + $0x350] sm:$0xff]
        %v535 = vld [vmem:[#allocation3 + $0x358] sm:$0xf]
        %v536 = vld [vmem:[#allocation3 + $0x35c] sm:$0xff]
        %v537 = vld [vmem:[#allocation3 + $0x364] sm:$0xff]
        %v538 = vld [vmem:[#allocation3 + $0x36c] sm:$0xf]
        %v539 = vld [vmem:[#allocation3 + $0x370] sm:$0xff]
        %v540 = vld [vmem:[#allocation3 + $0x378] sm:$0xff]
        %v541 = vld [vmem:[#allocation3 + $0x380] sm:$0xf]
        %v542 = vld [vmem:[#allocation3 + $0x384] sm:$0xff]
        %v543 = vld [vmem:[#allocation3 + $0x38c] sm:$0xff]
        %v544 = vld [vmem:[#allocation3 + $0x394] sm:$0xf]
        %v545 = vld [vmem:[#allocation3 + $0x398] sm:$0xff]
        %v546 = vld [vmem:[#allocation3 + $0x3a0] sm:$0xff]
        %v547 = vld [vmem:[#allocation3 + $0x3a8] sm:$0xf]
        %v548 = vld [vmem:[#allocation3 + $0x3ac] sm:$0xff]
        %v549 = vld [vmem:[#allocation3 + $0x3b4] sm:$0xff]
        %v550 = vld [vmem:[#allocation3 + $0x3bc] sm:$0xf]
        %v551 = vld [vmem:[#allocation3 + $0x3c0] sm:$0xff]
        %v552 = vld [vmem:[#allocation3 + $0x3c8] sm:$0xff]
        %v553 = vld [vmem:[#allocation3 + $0x3d0] sm:$0xf]
        %v554 = vld [vmem:[#allocation3 + $0x3d4] sm:$0xff]
        %v555 = vld [vmem:[#allocation3 + $0x3dc] sm:$0xff]
        %v556 = vld [vmem:[#allocation3 + $0x3e4] sm:$0xf]
        %v557 = vld [vmem:[#allocation3 + $0x3e8] sm:$0xff]
        %v558 = vld [vmem:[#allocation3 + $0x3f0] sm:$0xff]
        %v559 = vld [vmem:[#allocation3 + $0x3f8] sm:$0xf]
        %v560 = vld [vmem:[#allocation3 + $0x3fc] sm:$0xff]
        %v561 = vld [vmem:[#allocation3 + $0x404] sm:$0xff]
        %v562 = vld [vmem:[#allocation3 + $0x40c] sm:$0xf]
        %v565 = vunpack.c.l.b16 %v405
        %v566 = vunpack.c.h.b16 %v405
        %v567 = vunpack.c.l.b16 %v406
        %v568 = vunpack.c.h.b16 %v406
        %v569 = vpack.c.b16 %v565, %v565
        %v570 = vpack.c.b16 %v566, %v566
        %v571 = vpack.c.b16 %v567, %v567
        %v572 = vpack.c.b16 %v568, %v568
        %v732 = vunpack.c.l.b16 %v407
        %v733 = vunpack.c.h.b16 %v407
        %v734 = vunpack.c.l.b16 %v408
        %v735 = vunpack.c.h.b16 %v408
        %v736 = vunpack.c.l.b16 %v409
        %v737 = vunpack.c.l.b16 %v410
        %v738 = vunpack.c.h.b16 %v410
        %v739 = vunpack.c.l.b16 %v411
        %v740 = vunpack.c.h.b16 %v411
        %v741 = vunpack.c.l.b16 %v412
        %v742 = vunpack.c.l.b16 %v413
        %v743 = vunpack.c.h.b16 %v413
        %v744 = vunpack.c.l.b16 %v414
        %v745 = vunpack.c.h.b16 %v414
        %v746 = vunpack.c.l.b16 %v415
        %v747 = vunpack.c.l.b16 %v416
        %v748 = vunpack.c.h.b16 %v416
        %v749 = vunpack.c.l.b16 %v417
        %v750 = vunpack.c.h.b16 %v417
        %v751 = vunpack.c.l.b16 %v418
        %v752 = vunpack.c.l.b16 %v419
        %v753 = vunpack.c.h.b16 %v419
        %v754 = vunpack.c.l.b16 %v420
        %v755 = vunpack.c.h.b16 %v420
        %v756 = vunpack.c.l.b16 %v421
        %v757 = vunpack.c.l.b16 %v422
        %v758 = vunpack.c.h.b16 %v422
        %v759 = vunpack.c.l.b16 %v423
        %v760 = vunpack.c.h.b16 %v423
        %v761 = vunpack.c.l.b16 %v424
        %v762 = vunpack.c.l.b16 %v425
        %v763 = vunpack.c.h.b16 %v425
        %v764 = vunpack.c.l.b16 %v426
        %v765 = vunpack.c.h.b16 %v426
        %v766 = vunpack.c.l.b16 %v427
        %v767 = vunpack.c.l.b16 %v428
        %v768 = vunpack.c.h.b16 %v428
        %v769 = vunpack.c.l.b16 %v429
        %v770 = vunpack.c.h.b16 %v429
        %v771 = vunpack.c.l.b16 %v430
        %v772 = vunpack.c.l.b16 %v431
        %v773 = vunpack.c.h.b16 %v431
        %v774 = vunpack.c.l.b16 %v432
        %v775 = vunpack.c.h.b16 %v432
        %v776 = vunpack.c.l.b16 %v433
        %v777 = vunpack.c.l.b16 %v434
        %v778 = vunpack.c.h.b16 %v434
        %v779 = vunpack.c.l.b16 %v435
        %v780 = vunpack.c.h.b16 %v435
        %v781 = vunpack.c.l.b16 %v436
        %v782 = vunpack.c.l.b16 %v437
        %v783 = vunpack.c.h.b16 %v437
        %v784 = vunpack.c.l.b16 %v438
        %v785 = vunpack.c.h.b16 %v438
        %v786 = vunpack.c.l.b16 %v439
        %v787 = vunpack.c.l.b16 %v440
        %v788 = vunpack.c.h.b16 %v440
        %v789 = vunpack.c.l.b16 %v441
        %v790 = vunpack.c.h.b16 %v441
        %v791 = vunpack.c.l.b16 %v442
        %v792 = vunpack.c.l.b16 %v443
        %v793 = vunpack.c.h.b16 %v443
        %v794 = vunpack.c.l.b16 %v444
        %v795 = vunpack.c.h.b16 %v444
        %v796 = vunpack.c.l.b16 %v445
        %v797 = vunpack.c.l.b16 %v446
        %v798 = vunpack.c.h.b16 %v446
        %v799 = vunpack.c.l.b16 %v447
        %v800 = vunpack.c.h.b16 %v447
        %v801 = vunpack.c.l.b16 %v448
        %v802 = vunpack.c.l.b16 %v449
        %v803 = vunpack.c.h.b16 %v449
        %v804 = vunpack.c.l.b16 %v450
        %v805 = vunpack.c.h.b16 %v450
        %v806 = vunpack.c.l.b16 %v451
        %v807 = vunpack.c.l.b16 %v452
        %v808 = vunpack.c.h.b16 %v452
        %v809 = vunpack.c.l.b16 %v453
        %v810 = vunpack.c.h.b16 %v453
        %v811 = vunpack.c.l.b16 %v454
        %v812 = vunpack.c.l.b16 %v455
        %v813 = vunpack.c.h.b16 %v455
        %v814 = vunpack.c.l.b16 %v456
        %v815 = vunpack.c.h.b16 %v456
        %v816 = vunpack.c.l.b16 %v457
        %v817 = vunpack.c.l.b16 %v458
        %v818 = vunpack.c.h.b16 %v458
        %v819 = vunpack.c.l.b16 %v459
        %v820 = vunpack.c.h.b16 %v459
        %v821 = vunpack.c.l.b16 %v460
        %v822 = vunpack.c.l.b16 %v461
        %v823 = vunpack.c.h.b16 %v461
        %v824 = vunpack.c.l.b16 %v462
        %v825 = vunpack.c.h.b16 %v462
        %v826 = vunpack.c.l.b16 %v463
        %v827 = vunpack.c.l.b16 %v464
        %v828 = vunpack.c.h.b16 %v464
        %v829 = vunpack.c.l.b16 %v465
        %v830 = vunpack.c.h.b16 %v465
        %v831 = vunpack.c.l.b16 %v466
        %v832 = vunpack.c.l.b16 %v467
        %v833 = vunpack.c.h.b16 %v467
        %v834 = vunpack.c.l.b16 %v468
        %v835 = vunpack.c.h.b16 %v468
        %v836 = vunpack.c.l.b16 %v469
        %v837 = vunpack.c.l.b16 %v470
        %v838 = vunpack.c.h.b16 %v470
        %v839 = vunpack.c.l.b16 %v471
        %v840 = vunpack.c.h.b16 %v471
        %v841 = vunpack.c.l.b16 %v472
        %v842 = vunpack.c.l.b16 %v473
        %v843 = vunpack.c.h.b16 %v473
        %v844 = vunpack.c.l.b16 %v474
        %v845 = vunpack.c.h.b16 %v474
        %v846 = vunpack.c.l.b16 %v475
        %v847 = vunpack.c.l.b16 %v476
        %v848 = vunpack.c.h.b16 %v476
        %v849 = vunpack.c.l.b16 %v477
        %v850 = vunpack.c.h.b16 %v477
        %v851 = vunpack.c.l.b16 %v478
        %v852 = vunpack.c.l.b16 %v479
        %v853 = vunpack.c.h.b16 %v479
        %v854 = vunpack.c.l.b16 %v480
        %v855 = vunpack.c.h.b16 %v480
        %v856 = vunpack.c.l.b16 %v481
        %v857 = vunpack.c.l.b16 %v482
        %v858 = vunpack.c.h.b16 %v482
        %v859 = vunpack.c.l.b16 %v483
        %v860 = vunpack.c.h.b16 %v483
        %v861 = vunpack.c.l.b16 %v484
        %v862 = vunpack.c.l.b16 %v485
        %v863 = vunpack.c.h.b16 %v485
        %v864 = vunpack.c.l.b16 %v486
        %v865 = vunpack.c.h.b16 %v486
        %v866 = vunpack.c.l.b16 %v487
        %v867 = vunpack.c.l.b16 %v488
        %v868 = vunpack.c.h.b16 %v488
        %v869 = vunpack.c.l.b16 %v489
        %v870 = vunpack.c.h.b16 %v489
        %v871 = vunpack.c.l.b16 %v490
        %v872 = vunpack.c.l.b16 %v491
        %v873 = vunpack.c.h.b16 %v491
        %v874 = vunpack.c.l.b16 %v492
        %v875 = vunpack.c.h.b16 %v492
        %v876 = vunpack.c.l.b16 %v493
        %v877 = vunpack.c.l.b16 %v494
        %v878 = vunpack.c.h.b16 %v494
        %v879 = vunpack.c.l.b16 %v495
        %v880 = vunpack.c.h.b16 %v495
        %v881 = vunpack.c.l.b16 %v496
        %v882 = vunpack.c.l.b16 %v497
        %v883 = vunpack.c.h.b16 %v497
        %v884 = vunpack.c.l.b16 %v498
        %v885 = vunpack.c.h.b16 %v498
        %v886 = vunpack.c.l.b16 %v499
        %v887 = vunpack.c.l.b16 %v500
        %v888 = vunpack.c.h.b16 %v500
        %v889 = vunpack.c.l.b16 %v501
        %v890 = vunpack.c.h.b16 %v501
        %v891 = vunpack.c.l.b16 %v502
        %v892 = vunpack.c.l.b16 %v503
        %v893 = vunpack.c.h.b16 %v503
        %v894 = vunpack.c.l.b16 %v504
        %v895 = vunpack.c.h.b16 %v504
        %v896 = vunpack.c.l.b16 %v505
        %v897 = vunpack.c.l.b16 %v506
        %v898 = vunpack.c.h.b16 %v506
        %v899 = vunpack.c.l.b16 %v507
        %v900 = vunpack.c.h.b16 %v507
        %v901 = vunpack.c.l.b16 %v508
        %v902 = vunpack.c.l.b16 %v509
        %v903 = vunpack.c.h.b16 %v509
        %v904 = vunpack.c.l.b16 %v510
        %v905 = vunpack.c.h.b16 %v510
        %v906 = vunpack.c.l.b16 %v511
        %v907 = vunpack.c.l.b16 %v512
        %v908 = vunpack.c.h.b16 %v512
        %v909 = vunpack.c.l.b16 %v513
        %v910 = vunpack.c.h.b16 %v513
        %v911 = vunpack.c.l.b16 %v514
        %v912 = vunpack.c.l.b16 %v515
        %v913 = vunpack.c.h.b16 %v515
        %v914 = vunpack.c.l.b16 %v516
        %v915 = vunpack.c.h.b16 %v516
        %v916 = vunpack.c.l.b16 %v517
        %v917 = vunpack.c.l.b16 %v518
        %v918 = vunpack.c.h.b16 %v518
        %v919 = vunpack.c.l.b16 %v519
        %v920 = vunpack.c.h.b16 %v519
        %v921 = vunpack.c.l.b16 %v520
        %v922 = vunpack.c.l.b16 %v521
        %v923 = vunpack.c.h.b16 %v521
        %v924 = vunpack.c.l.b16 %v522
        %v925 = vunpack.c.h.b16 %v522
        %v926 = vunpack.c.l.b16 %v523
        %v927 = vunpack.c.l.b16 %v524
        %v928 = vunpack.c.h.b16 %v524
        %v929 = vunpack.c.l.b16 %v525
        %v930 = vunpack.c.h.b16 %v525
        %v931 = vunpack.c.l.b16 %v526
        %v932 = vunpack.c.l.b16 %v527
        %v933 = vunpack.c.h.b16 %v527
        %v934 = vunpack.c.l.b16 %v528
        %v935 = vunpack.c.h.b16 %v528
        %v936 = vunpack.c.l.b16 %v529
        %v937 = vunpack.c.l.b16 %v530
        %v938 = vunpack.c.h.b16 %v530
        %v939 = vunpack.c.l.b16 %v531
        %v940 = vunpack.c.h.b16 %v531
        %v941 = vunpack.c.l.b16 %v532
        %v942 = vunpack.c.l.b16 %v533
        %v943 = vunpack.c.h.b16 %v533
        %v944 = vunpack.c.l.b16 %v534
        %v945 = vunpack.c.h.b16 %v534
        %v946 = vunpack.c.l.b16 %v535
        %v947 = vunpack.c.l.b16 %v536
        %v948 = vunpack.c.h.b16 %v536
        %v949 = vunpack.c.l.b16 %v537
        %v950 = vunpack.c.h.b16 %v537
        %v951 = vunpack.c.l.b16 %v538
        %v952 = vunpack.c.l.b16 %v539
        %v953 = vunpack.c.h.b16 %v539
        %v954 = vunpack.c.l.b16 %v540
        %v955 = vunpack.c.h.b16 %v540
        %v956 = vunpack.c.l.b16 %v541
        %v957 = vunpack.c.l.b16 %v542
        %v958 = vunpack.c.h.b16 %v542
        %v959 = vunpack.c.l.b16 %v543
        %v960 = vunpack.c.h.b16 %v543
        %v961 = vunpack.c.l.b16 %v544
        %v962 = vunpack.c.l.b16 %v545
        %v963 = vunpack.c.h.b16 %v545
        %v964 = vunpack.c.l.b16 %v546
        %v965 = vunpack.c.h.b16 %v546
        %v966 = vunpack.c.l.b16 %v547
        %v967 = vunpack.c.l.b16 %v548
        %v968 = vunpack.c.h.b16 %v548
        %v969 = vunpack.c.l.b16 %v549
        %v970 = vunpack.c.h.b16 %v549
        %v971 = vunpack.c.l.b16 %v550
        %v972 = vunpack.c.l.b16 %v551
        %v973 = vunpack.c.h.b16 %v551
        %v974 = vunpack.c.l.b16 %v552
        %v975 = vunpack.c.h.b16 %v552
        %v976 = vunpack.c.l.b16 %v553
        %v977 = vunpack.c.l.b16 %v554
        %v978 = vunpack.c.h.b16 %v554
        %v979 = vunpack.c.l.b16 %v555
        %v980 = vunpack.c.h.b16 %v555
        %v981 = vunpack.c.l.b16 %v556
        %v982 = vunpack.c.l.b16 %v557
        %v983 = vunpack.c.h.b16 %v557
        %v984 = vunpack.c.l.b16 %v558
        %v985 = vunpack.c.h.b16 %v558
        %v986 = vunpack.c.l.b16 %v559
        %v987 = vunpack.c.l.b16 %v560
        %v988 = vunpack.c.h.b16 %v560
        %v989 = vunpack.c.l.b16 %v561
        %v990 = vunpack.c.h.b16 %v561
        %v991 = vunpack.c.l.b16 %v562
        %v992 = vpack.c.b16 %v737, %v732
        %v993 = vpack.c.b16 %v738, %v733
        %v994 = vpack.c.b16 %v739, %v734
        %v995 = vpack.c.b16 %v740, %v735
        %v996 = vpack.c.b16 %v741, %v736
        %v997 = vpack.c.b16 %v747, %v742
        %v998 = vpack.c.b16 %v748, %v743
        %v999 = vpack.c.b16 %v749, %v744
        %v1000 = vpack.c.b16 %v750, %v745
        %v1001 = vpack.c.b16 %v751, %v746
        %v1002 = vpack.c.b16 %v757, %v752
        %v1003 = vpack.c.b16 %v758, %v753
        %v1004 = vpack.c.b16 %v759, %v754
        %v1005 = vpack.c.b16 %v760, %v755
        %v1006 = vpack.c.b16 %v761, %v756
        %v1007 = vpack.c.b16 %v767, %v762
        %v1008 = vpack.c.b16 %v768, %v763
        %v1009 = vpack.c.b16 %v769, %v764
        %v1010 = vpack.c.b16 %v770, %v765
        %v1011 = vpack.c.b16 %v771, %v766
        %v1012 = vpack.c.b16 %v777, %v772
        %v1013 = vpack.c.b16 %v778, %v773
        %v1014 = vpack.c.b16 %v779, %v774
        %v1015 = vpack.c.b16 %v780, %v775
        %v1016 = vpack.c.b16 %v781, %v776
        %v1017 = vpack.c.b16 %v787, %v782
        %v1018 = vpack.c.b16 %v788, %v783
        %v1019 = vpack.c.b16 %v789, %v784
        %v1020 = vpack.c.b16 %v790, %v785
        %v1021 = vpack.c.b16 %v791, %v786
        %v1022 = vpack.c.b16 %v797, %v792
        %v1023 = vpack.c.b16 %v798, %v793
        %v1024 = vpack.c.b16 %v799, %v794
        %v1025 = vpack.c.b16 %v800, %v795
        %v1026 = vpack.c.b16 %v801, %v796
        %v1027 = vpack.c.b16 %v807, %v802
        %v1028 = vpack.c.b16 %v808, %v803
        %v1029 = vpack.c.b16 %v809, %v804
        %v1030 = vpack.c.b16 %v810, %v805
        %v1031 = vpack.c.b16 %v811, %v806
        %v1032 = vpack.c.b16 %v817, %v812
        %v1033 = vpack.c.b16 %v818, %v813
        %v1034 = vpack.c.b16 %v819, %v814
        %v1035 = vpack.c.b16 %v820, %v815
        %v1036 = vpack.c.b16 %v821, %v816
        %v1037 = vpack.c.b16 %v827, %v822
        %v1038 = vpack.c.b16 %v828, %v823
        %v1039 = vpack.c.b16 %v829, %v824
        %v1040 = vpack.c.b16 %v830, %v825
        %v1041 = vpack.c.b16 %v831, %v826
        %v1042 = vpack.c.b16 %v837, %v832
        %v1043 = vpack.c.b16 %v838, %v833
        %v1044 = vpack.c.b16 %v839, %v834
        %v1045 = vpack.c.b16 %v840, %v835
        %v1046 = vpack.c.b16 %v841, %v836
        %v1047 = vpack.c.b16 %v847, %v842
        %v1048 = vpack.c.b16 %v848, %v843
        %v1049 = vpack.c.b16 %v849, %v844
        %v1050 = vpack.c.b16 %v850, %v845
        %v1051 = vpack.c.b16 %v851, %v846
        %v1052 = vpack.c.b16 %v857, %v852
        %v1053 = vpack.c.b16 %v858, %v853
        %v1054 = vpack.c.b16 %v859, %v854
        %v1055 = vpack.c.b16 %v860, %v855
        %v1056 = vpack.c.b16 %v861, %v856
        %v1057 = vpack.c.b16 %v867, %v862
        %v1058 = vpack.c.b16 %v868, %v863
        %v1059 = vpack.c.b16 %v869, %v864
        %v1060 = vpack.c.b16 %v870, %v865
        %v1061 = vpack.c.b16 %v871, %v866
        %v1062 = vpack.c.b16 %v877, %v872
        %v1063 = vpack.c.b16 %v878, %v873
        %v1064 = vpack.c.b16 %v879, %v874
        %v1065 = vpack.c.b16 %v880, %v875
        %v1066 = vpack.c.b16 %v881, %v876
        %v1067 = vpack.c.b16 %v887, %v882
        %v1068 = vpack.c.b16 %v888, %v883
        %v1069 = vpack.c.b16 %v889, %v884
        %v1070 = vpack.c.b16 %v890, %v885
        %v1071 = vpack.c.b16 %v891, %v886
        %v1072 = vpack.c.b16 %v897, %v892
        %v1073 = vpack.c.b16 %v898, %v893
        %v1074 = vpack.c.b16 %v899, %v894
        %v1075 = vpack.c.b16 %v900, %v895
        %v1076 = vpack.c.b16 %v901, %v896
        %v1077 = vpack.c.b16 %v907, %v902
        %v1078 = vpack.c.b16 %v908, %v903
        %v1079 = vpack.c.b16 %v909, %v904
        %v1080 = vpack.c.b16 %v910, %v905
        %v1081 = vpack.c.b16 %v911, %v906
        %v1082 = vpack.c.b16 %v917, %v912
        %v1083 = vpack.c.b16 %v918, %v913
        %v1084 = vpack.c.b16 %v919, %v914
        %v1085 = vpack.c.b16 %v920, %v915
        %v1086 = vpack.c.b16 %v921, %v916
        %v1087 = vpack.c.b16 %v927, %v922
        %v1088 = vpack.c.b16 %v928, %v923
        %v1089 = vpack.c.b16 %v929, %v924
        %v1090 = vpack.c.b16 %v930, %v925
        %v1091 = vpack.c.b16 %v931, %v926
        %v1092 = vpack.c.b16 %v937, %v932
        %v1093 = vpack.c.b16 %v938, %v933
        %v1094 = vpack.c.b16 %v939, %v934
        %v1095 = vpack.c.b16 %v940, %v935
        %v1096 = vpack.c.b16 %v941, %v936
        %v1097 = vpack.c.b16 %v947, %v942
        %v1098 = vpack.c.b16 %v948, %v943
        %v1099 = vpack.c.b16 %v949, %v944
        %v1100 = vpack.c.b16 %v950, %v945
        %v1101 = vpack.c.b16 %v951, %v946
        %v1102 = vpack.c.b16 %v957, %v952
        %v1103 = vpack.c.b16 %v958, %v953
        %v1104 = vpack.c.b16 %v959, %v954
        %v1105 = vpack.c.b16 %v960, %v955
        %v1106 = vpack.c.b16 %v961, %v956
        %v1107 = vpack.c.b16 %v967, %v962
        %v1108 = vpack.c.b16 %v968, %v963
        %v1109 = vpack.c.b16 %v969, %v964
        %v1110 = vpack.c.b16 %v970, %v965
        %v1111 = vpack.c.b16 %v971, %v966
        %v1112 = vpack.c.b16 %v977, %v972
        %v1113 = vpack.c.b16 %v978, %v973
        %v1114 = vpack.c.b16 %v979, %v974
        %v1115 = vpack.c.b16 %v980, %v975
        %v1116 = vpack.c.b16 %v981, %v976
        %v1117 = vpack.c.b16 %v987, %v982
        %v1118 = vpack.c.b16 %v988, %v983
        %v1119 = vpack.c.b16 %v989, %v984
        %v1120 = vpack.c.b16 %v990, %v985
        %v1121 = vpack.c.b16 %v991, %v986
        %vm1252 = vcmask 261120
        %v1254 = vsel %vm1252, %v572, 0
        %1256 = vmatpush.bf16.msra.mxu0 %v1027
        %1257 = vmatpush.bf16.msra.mxu0 %v1022
        %1258 = vmatpush.bf16.msra.mxu0 %v1017
        %1259 = vmatpush.bf16.msra.mxu0 %v1012
        %1260 = vmatpush.bf16.msra.mxu0 %v1007
        %1261 = vmatpush.bf16.msra.mxu0 %v1002
        %1262 = vmatpush.bf16.msra.mxu0 %v997
        %1263 = vmatpush.bf16.msra.mxu0 %v992
        %1264 = vmatmul.bf16.gmra.mxu0 %v569
        %v1265 = vpop.f32.mrf.mxu0
        %v1266 = vadd.f32 0.0, %v1265
        %v1267 = vpop.f32.mrf.mxu0
        %1268 = vdwg.mxu0
        %1269 = vmatpush.bf16.msra.mxu0 %v1067
        %1270 = vmatpush.bf16.msra.mxu0 %v1062
        %1271 = vmatpush.bf16.msra.mxu0 %v1057
        %1272 = vmatpush.bf16.msra.mxu0 %v1052
        %1273 = vmatpush.bf16.msra.mxu0 %v1047
        %1274 = vmatpush.bf16.msra.mxu0 %v1042
        %1275 = vmatpush.bf16.msra.mxu0 %v1037
        %1276 = vmatpush.bf16.msra.mxu0 %v1032
        %1277 = vmatmul.bf16.gmra.mxu0 %v570
        %v1278 = vpop.f32.mrf.mxu0
        %v1279 = vadd.f32 %v1266, %v1278
        %v1280 = vpop.f32.mrf.mxu0
        %1281 = vdwg.mxu0
        %1282 = vmatpush.bf16.msra.mxu0 %v1107
        %1283 = vmatpush.bf16.msra.mxu0 %v1102
        %1284 = vmatpush.bf16.msra.mxu0 %v1097
        %1285 = vmatpush.bf16.msra.mxu0 %v1092
        %1286 = vmatpush.bf16.msra.mxu0 %v1087
        %1287 = vmatpush.bf16.msra.mxu0 %v1082
        %1288 = vmatpush.bf16.msra.mxu0 %v1077
        %1289 = vmatpush.bf16.msra.mxu0 %v1072
        %1290 = vmatmul.bf16.gmra.mxu0 %v571
        %v1291 = vpop.f32.mrf.mxu0
        %v1292 = vadd.f32 %v1279, %v1291
        %v1293 = vpop.f32.mrf.mxu0
        %1294 = vdwg.mxu0
        %1295 = vmatpush.bf16.msra.mxu0 0
        %1296 = vmatpush.bf16.msra.mxu0 0
        %1297 = vmatpush.bf16.msra.mxu0 0
        %1298 = vmatpush.bf16.msra.mxu0 0
        %1299 = vmatpush.bf16.msra.mxu0 0
        %1300 = vmatpush.bf16.msra.mxu0 0
        %1301 = vmatpush.bf16.msra.mxu0 %v1117
        %1302 = vmatpush.bf16.msra.mxu0 %v1112
        %1303 = vmatmul.bf16.gmra.mxu0 %v1254
        %v1304 = vpop.f32.mrf.mxu0
        %v1305 = vadd.f32 %v1292, %v1304
        %v1306 = vpop.f32.mrf.mxu0
        %1307 = vdwg.mxu0
        %1308 = vmatpush.bf16.msra.mxu0 %v1028
        %1309 = vmatpush.bf16.msra.mxu0 %v1023
        %1310 = vmatpush.bf16.msra.mxu0 %v1018
        %1311 = vmatpush.bf16.msra.mxu0 %v1013
        %1312 = vmatpush.bf16.msra.mxu0 %v1008
        %1313 = vmatpush.bf16.msra.mxu0 %v1003
        %1314 = vmatpush.bf16.msra.mxu0 %v998
        %1315 = vmatpush.bf16.msra.mxu0 %v993
        %1316 = vmatmul.bf16.gmra.mxu0 %v569
        %v1317 = vpop.f32.mrf.mxu0
        %v1318 = vadd.f32 0.0, %v1317
        %v1319 = vpop.f32.mrf.mxu0
        %1320 = vdwg.mxu0
        %1321 = vmatpush.bf16.msra.mxu0 %v1068
        %1322 = vmatpush.bf16.msra.mxu0 %v1063
        %1323 = vmatpush.bf16.msra.mxu0 %v1058
        %1324 = vmatpush.bf16.msra.mxu0 %v1053
        %1325 = vmatpush.bf16.msra.mxu0 %v1048
        %1326 = vmatpush.bf16.msra.mxu0 %v1043
        %1327 = vmatpush.bf16.msra.mxu0 %v1038
        %1328 = vmatpush.bf16.msra.mxu0 %v1033
        %1329 = vmatmul.bf16.gmra.mxu0 %v570
        %v1330 = vpop.f32.mrf.mxu0
        %v1331 = vadd.f32 %v1318, %v1330
        %v1332 = vpop.f32.mrf.mxu0
        %1333 = vdwg.mxu0
        %1334 = vmatpush.bf16.msra.mxu0 %v1108
        %1335 = vmatpush.bf16.msra.mxu0 %v1103
        %1336 = vmatpush.bf16.msra.mxu0 %v1098
        %1337 = vmatpush.bf16.msra.mxu0 %v1093
        %1338 = vmatpush.bf16.msra.mxu0 %v1088
        %1339 = vmatpush.bf16.msra.mxu0 %v1083
        %1340 = vmatpush.bf16.msra.mxu0 %v1078
        %1341 = vmatpush.bf16.msra.mxu0 %v1073
        %1342 = vmatmul.bf16.gmra.mxu0 %v571
        %v1343 = vpop.f32.mrf.mxu0
        %v1344 = vadd.f32 %v1331, %v1343
        %v1345 = vpop.f32.mrf.mxu0
        %1346 = vdwg.mxu0
        %1347 = vmatpush.bf16.msra.mxu0 0
        %1348 = vmatpush.bf16.msra.mxu0 0
        %1349 = vmatpush.bf16.msra.mxu0 0
        %1350 = vmatpush.bf16.msra.mxu0 0
        %1351 = vmatpush.bf16.msra.mxu0 0
        %1352 = vmatpush.bf16.msra.mxu0 0
        %1353 = vmatpush.bf16.msra.mxu0 %v1118
        %1354 = vmatpush.bf16.msra.mxu0 %v1113
        %1355 = vmatmul.bf16.gmra.mxu0 %v1254
        %v1356 = vpop.f32.mrf.mxu0
        %v1357 = vadd.f32 %v1344, %v1356
        %v1358 = vpop.f32.mrf.mxu0
        %1359 = vdwg.mxu0
        %1360 = vmatpush.bf16.msra.mxu0 %v1029
        %1361 = vmatpush.bf16.msra.mxu0 %v1024
        %1362 = vmatpush.bf16.msra.mxu0 %v1019
        %1363 = vmatpush.bf16.msra.mxu0 %v1014
        %1364 = vmatpush.bf16.msra.mxu0 %v1009
        %1365 = vmatpush.bf16.msra.mxu0 %v1004
        %1366 = vmatpush.bf16.msra.mxu0 %v999
        %1367 = vmatpush.bf16.msra.mxu0 %v994
        %1368 = vmatmul.bf16.gmra.mxu0 %v569
        %v1369 = vpop.f32.mrf.mxu0
        %v1370 = vadd.f32 0.0, %v1369
        %v1371 = vpop.f32.mrf.mxu0
        %1372 = vdwg.mxu0
        %1373 = vmatpush.bf16.msra.mxu0 %v1069
        %1374 = vmatpush.bf16.msra.mxu0 %v1064
        %1375 = vmatpush.bf16.msra.mxu0 %v1059
        %1376 = vmatpush.bf16.msra.mxu0 %v1054
        %1377 = vmatpush.bf16.msra.mxu0 %v1049
        %1378 = vmatpush.bf16.msra.mxu0 %v1044
        %1379 = vmatpush.bf16.msra.mxu0 %v1039
        %1380 = vmatpush.bf16.msra.mxu0 %v1034
        %1381 = vmatmul.bf16.gmra.mxu0 %v570
        %v1382 = vpop.f32.mrf.mxu0
        %v1383 = vadd.f32 %v1370, %v1382
        %v1384 = vpop.f32.mrf.mxu0
        %1385 = vdwg.mxu0
        %1386 = vmatpush.bf16.msra.mxu0 %v1109
        %1387 = vmatpush.bf16.msra.mxu0 %v1104
        %1388 = vmatpush.bf16.msra.mxu0 %v1099
        %1389 = vmatpush.bf16.msra.mxu0 %v1094
        %1390 = vmatpush.bf16.msra.mxu0 %v1089
        %1391 = vmatpush.bf16.msra.mxu0 %v1084
        %1392 = vmatpush.bf16.msra.mxu0 %v1079
        %1393 = vmatpush.bf16.msra.mxu0 %v1074
        %1394 = vmatmul.bf16.gmra.mxu0 %v571
        %v1395 = vpop.f32.mrf.mxu0
        %v1396 = vadd.f32 %v1383, %v1395
        %v1397 = vpop.f32.mrf.mxu0
        %1398 = vdwg.mxu0
        %1399 = vmatpush.bf16.msra.mxu0 0
        %1400 = vmatpush.bf16.msra.mxu0 0
        %1401 = vmatpush.bf16.msra.mxu0 0
        %1402 = vmatpush.bf16.msra.mxu0 0
        %1403 = vmatpush.bf16.msra.mxu0 0
        %1404 = vmatpush.bf16.msra.mxu0 0
        %1405 = vmatpush.bf16.msra.mxu0 %v1119
        %1406 = vmatpush.bf16.msra.mxu0 %v1114
        %1407 = vmatmul.bf16.gmra.mxu0 %v1254
        %v1408 = vpop.f32.mrf.mxu0
        %v1409 = vadd.f32 %v1396, %v1408
        %v1410 = vpop.f32.mrf.mxu0
        %1411 = vdwg.mxu0
        %1412 = vmatpush.bf16.msra.mxu0 %v1030
        %1413 = vmatpush.bf16.msra.mxu0 %v1025
        %1414 = vmatpush.bf16.msra.mxu0 %v1020
        %1415 = vmatpush.bf16.msra.mxu0 %v1015
        %1416 = vmatpush.bf16.msra.mxu0 %v1010
        %1417 = vmatpush.bf16.msra.mxu0 %v1005
        %1418 = vmatpush.bf16.msra.mxu0 %v1000
        %1419 = vmatpush.bf16.msra.mxu0 %v995
        %1420 = vmatmul.bf16.gmra.mxu0 %v569
        %v1421 = vpop.f32.mrf.mxu0
        %v1422 = vadd.f32 0.0, %v1421
        %v1423 = vpop.f32.mrf.mxu0
        %1424 = vdwg.mxu0
        %1425 = vmatpush.bf16.msra.mxu0 %v1070
        %1426 = vmatpush.bf16.msra.mxu0 %v1065
        %1427 = vmatpush.bf16.msra.mxu0 %v1060
        %1428 = vmatpush.bf16.msra.mxu0 %v1055
        %1429 = vmatpush.bf16.msra.mxu0 %v1050
        %1430 = vmatpush.bf16.msra.mxu0 %v1045
        %1431 = vmatpush.bf16.msra.mxu0 %v1040
        %1432 = vmatpush.bf16.msra.mxu0 %v1035
        %1433 = vmatmul.bf16.gmra.mxu0 %v570
        %v1434 = vpop.f32.mrf.mxu0
        %v1435 = vadd.f32 %v1422, %v1434
        %v1436 = vpop.f32.mrf.mxu0
        %1437 = vdwg.mxu0
        %1438 = vmatpush.bf16.msra.mxu0 %v1110
        %1439 = vmatpush.bf16.msra.mxu0 %v1105
        %1440 = vmatpush.bf16.msra.mxu0 %v1100
        %1441 = vmatpush.bf16.msra.mxu0 %v1095
        %1442 = vmatpush.bf16.msra.mxu0 %v1090
        %1443 = vmatpush.bf16.msra.mxu0 %v1085
        %1444 = vmatpush.bf16.msra.mxu0 %v1080
        %1445 = vmatpush.bf16.msra.mxu0 %v1075
        %1446 = vmatmul.bf16.gmra.mxu0 %v571
        %v1447 = vpop.f32.mrf.mxu0
        %v1448 = vadd.f32 %v1435, %v1447
        %v1449 = vpop.f32.mrf.mxu0
        %1450 = vdwg.mxu0
        %1451 = vmatpush.bf16.msra.mxu0 0
        %1452 = vmatpush.bf16.msra.mxu0 0
        %1453 = vmatpush.bf16.msra.mxu0 0
        %1454 = vmatpush.bf16.msra.mxu0 0
        %1455 = vmatpush.bf16.msra.mxu0 0
        %1456 = vmatpush.bf16.msra.mxu0 0
        %1457 = vmatpush.bf16.msra.mxu0 %v1120
        %1458 = vmatpush.bf16.msra.mxu0 %v1115
        %1459 = vmatmul.bf16.gmra.mxu0 %v1254
        %v1460 = vpop.f32.mrf.mxu0
        %v1461 = vadd.f32 %v1448, %v1460
        %v1462 = vpop.f32.mrf.mxu0
        %1463 = vdwg.mxu0
        %1464 = vmatpush.bf16.msra.mxu0 %v1031
        %1465 = vmatpush.bf16.msra.mxu0 %v1026
        %1466 = vmatpush.bf16.msra.mxu0 %v1021
        %1467 = vmatpush.bf16.msra.mxu0 %v1016
        %1468 = vmatpush.bf16.msra.mxu0 %v1011
        %1469 = vmatpush.bf16.msra.mxu0 %v1006
        %1470 = vmatpush.bf16.msra.mxu0 %v1001
        %1471 = vmatpush.bf16.msra.mxu0 %v996
        %1472 = vmatmul.bf16.gmra.mxu0 %v569
        %v1473 = vpop.f32.mrf.mxu0
        %v1474 = vadd.f32 0.0, %v1473
        %v1475 = vpop.f32.mrf.mxu0
        %1476 = vdwg.mxu0
        %1477 = vmatpush.bf16.msra.mxu0 %v1071
        %1478 = vmatpush.bf16.msra.mxu0 %v1066
        %1479 = vmatpush.bf16.msra.mxu0 %v1061
        %1480 = vmatpush.bf16.msra.mxu0 %v1056
        %1481 = vmatpush.bf16.msra.mxu0 %v1051
        %1482 = vmatpush.bf16.msra.mxu0 %v1046
        %1483 = vmatpush.bf16.msra.mxu0 %v1041
        %1484 = vmatpush.bf16.msra.mxu0 %v1036
        %1485 = vmatmul.bf16.gmra.mxu0 %v570
        %v1486 = vpop.f32.mrf.mxu0
        %v1487 = vadd.f32 %v1474, %v1486
        %v1488 = vpop.f32.mrf.mxu0
        %1489 = vdwg.mxu0
        %1490 = vmatpush.bf16.msra.mxu0 %v1111
        %1491 = vmatpush.bf16.msra.mxu0 %v1106
        %1492 = vmatpush.bf16.msra.mxu0 %v1101
        %1493 = vmatpush.bf16.msra.mxu0 %v1096
        %1494 = vmatpush.bf16.msra.mxu0 %v1091
        %1495 = vmatpush.bf16.msra.mxu0 %v1086
        %1496 = vmatpush.bf16.msra.mxu0 %v1081
        %1497 = vmatpush.bf16.msra.mxu0 %v1076
        %1498 = vmatmul.bf16.gmra.mxu0 %v571
        %v1499 = vpop.f32.mrf.mxu0
        %v1500 = vadd.f32 %v1487, %v1499
        %v1501 = vpop.f32.mrf.mxu0
        %1502 = vdwg.mxu0
        %1503 = vmatpush.bf16.msra.mxu0 0
        %1504 = vmatpush.bf16.msra.mxu0 0
        %1505 = vmatpush.bf16.msra.mxu0 0
        %1506 = vmatpush.bf16.msra.mxu0 0
        %1507 = vmatpush.bf16.msra.mxu0 0
        %1508 = vmatpush.bf16.msra.mxu0 0
        %1509 = vmatpush.bf16.msra.mxu0 %v1121
        %1510 = vmatpush.bf16.msra.mxu0 %v1116
        %1511 = vmatmul.bf16.gmra.mxu0 %v1254
        %v1512 = vpop.f32.mrf.mxu0
        %v1513 = vadd.f32 %v1500, %v1512
        %v1514 = vpop.f32.mrf.mxu0
        %1515 = vdwg.mxu0
        %v1516 = vmax.f32 %v1305, 0.0
        %v1517 = vmax.f32 %v1357, 0.0
        %v1518 = vmax.f32 %v1409, 0.0
        %v1519 = vmax.f32 %v1461, 0.0
        %v1520 = vmax.f32 %v1513, 0.0
        %v1521 = vpack.c.bf16 %v1516, %v1516
        %v1522 = vpack.c.bf16 %v1517, %v1517
        %v1523 = vpack.c.bf16 %v1518, %v1518
        %v1524 = vpack.c.bf16 %v1519, %v1519
        %v1525 = vpack.c.bf16 %v1520, %v1520
        %v1526 = vld [vmem:[%s2] sm:$0xf]
        %v1527 = vld [vmem:[%s2 + $0x4] sm:$0xf]
        %v1528 = vld [vmem:[%s2 + $0x8] sm:$0xf]
        %v1529 = vld [vmem:[%s2 + $0xc] sm:$0xf]
        %v1530 = vld [vmem:[%s2 + $0x10] sm:$0xf]
        %v1531 = vld [vmem:[%s2 + $0x14] sm:$0xf]
        %v1532 = vld [vmem:[%s2 + $0x18] sm:$0xf]
        %v1533 = vld [vmem:[%s2 + $0x1c] sm:$0xf]
        %v1534 = vld [vmem:[%s2 + $0x20] sm:$0xf]
        %v1535 = vld [vmem:[%s2 + $0x24] sm:$0xf]
        %v1536 = vld [vmem:[%s2 + $0x28] sm:$0xf]
        %v1537 = vld [vmem:[%s2 + $0x2c] sm:$0xf]
        %v1538 = vld [vmem:[%s2 + $0x30] sm:$0xf]
        %v1539 = vld [vmem:[%s2 + $0x34] sm:$0xf]
        %v1540 = vld [vmem:[%s2 + $0x38] sm:$0xf]
        %v1541 = vld [vmem:[%s2 + $0x3c] sm:$0xf]
        %v1542 = vld [vmem:[%s2 + $0x40] sm:$0xf]
        %v1543 = vld [vmem:[%s2 + $0x44] sm:$0xf]
        %v1544 = vld [vmem:[%s2 + $0x48] sm:$0xf]
        %v1545 = vld [vmem:[%s2 + $0x4c] sm:$0xf]
        %v1546 = vld [vmem:[%s2 + $0x50] sm:$0xf]
        %v1547 = vld [vmem:[%s2 + $0x54] sm:$0xf]
        %v1548 = vld [vmem:[%s2 + $0x58] sm:$0xf]
        %v1549 = vld [vmem:[%s2 + $0x5c] sm:$0xf]
        %v1550 = vld [vmem:[%s2 + $0x60] sm:$0xf]
        %v1551 = vld [vmem:[%s2 + $0x64] sm:$0xf]
        %v1552 = vld [vmem:[%s2 + $0x68] sm:$0xf]
        %v1553 = vld [vmem:[%s2 + $0x6c] sm:$0xf]
        %v1554 = vld [vmem:[%s2 + $0x70] sm:$0xf]
        %v1555 = vld [vmem:[%s2 + $0x74] sm:$0xf]
        %v1556 = vld [vmem:[%s2 + $0x78] sm:$0xf]
        %v1557 = vld [vmem:[%s2 + $0x7c] sm:$0xf]
        %v1558 = vld [vmem:[%s2 + $0x80] sm:$0xf]
        %v1559 = vld [vmem:[%s2 + $0x84] sm:$0xf]
        %v1560 = vld [vmem:[%s2 + $0x88] sm:$0xf]
        %v1561 = vld [vmem:[%s2 + $0x8c] sm:$0xf]
        %v1562 = vld [vmem:[%s2 + $0x90] sm:$0xf]
        %v1563 = vld [vmem:[%s2 + $0x94] sm:$0xf]
        %v1564 = vld [vmem:[%s2 + $0x98] sm:$0xf]
        %v1565 = vld [vmem:[%s2 + $0x9c] sm:$0xf]
        %v1566 = vld [vmem:[%s2 + $0xa0] sm:$0xf]
        %v1567 = vld [vmem:[%s2 + $0xa4] sm:$0xf]
        %v1568 = vld [vmem:[%s2 + $0xa8] sm:$0xf]
        %v1569 = vld [vmem:[%s2 + $0xac] sm:$0xf]
        %v1570 = vld [vmem:[%s2 + $0xb0] sm:$0xf]
        %v1571 = vld [vmem:[%s2 + $0xb4] sm:$0xf]
        %v1572 = vld [vmem:[%s2 + $0xb8] sm:$0xf]
        %v1573 = vld [vmem:[%s2 + $0xbc] sm:$0xf]
        %v1574 = vld [vmem:[%s2 + $0xc0] sm:$0xf]
        %v1575 = vld [vmem:[%s2 + $0xc4] sm:$0xf]
        %v1576 = vld [vmem:[%s2 + $0xc8] sm:$0xf]
        %v1577 = vld [vmem:[%s2 + $0xcc] sm:$0xf]
        %v1578 = vld [vmem:[%s2 + $0xd0] sm:$0xf]
        %v1579 = vld [vmem:[%s2 + $0xd4] sm:$0xf]
        %v1580 = vld [vmem:[%s2 + $0xd8] sm:$0xf]
        %v1581 = vld [vmem:[%s2 + $0xdc] sm:$0xf]
        %v1582 = vld [vmem:[%s2 + $0xe0] sm:$0xf]
        %v1583 = vld [vmem:[%s2 + $0xe4] sm:$0xf]
        %v1584 = vld [vmem:[%s2 + $0xe8] sm:$0xf]
        %v1585 = vld [vmem:[%s2 + $0xec] sm:$0xf]
        %v1586 = vld [vmem:[%s2 + $0xf0] sm:$0xf]
        %v1587 = vld [vmem:[%s2 + $0xf4] sm:$0xf]
        %v1588 = vld [vmem:[%s2 + $0xf8] sm:$0xf]
        %v1589 = vld [vmem:[%s2 + $0xfc] sm:$0xf]
        %v1590 = vld [vmem:[%s2 + $0x100] sm:$0xf]
        %v1591 = vld [vmem:[%s2 + $0x104] sm:$0xf]
        %v1592 = vld [vmem:[%s2 + $0x108] sm:$0xf]
        %v1593 = vld [vmem:[%s2 + $0x10c] sm:$0xf]
        %v1594 = vld [vmem:[%s2 + $0x110] sm:$0xf]
        %v1595 = vld [vmem:[%s2 + $0x114] sm:$0xf]
        %v1596 = vld [vmem:[%s2 + $0x118] sm:$0xf]
        %v1597 = vld [vmem:[%s2 + $0x11c] sm:$0xf]
        %v1598 = vld [vmem:[%s2 + $0x120] sm:$0xf]
        %v1599 = vld [vmem:[%s2 + $0x124] sm:$0xf]
        %v1600 = vld [vmem:[%s2 + $0x128] sm:$0xf]
        %v1601 = vld [vmem:[%s2 + $0x12c] sm:$0xf]
        %v1602 = vld [vmem:[%s2 + $0x130] sm:$0xf]
        %v1603 = vld [vmem:[%s2 + $0x134] sm:$0xf]
        %v1682 = vunpack.c.l.b16 %v1526
        %v1683 = vunpack.c.l.b16 %v1527
        %v1684 = vunpack.c.l.b16 %v1528
        %v1685 = vunpack.c.l.b16 %v1529
        %v1686 = vunpack.c.l.b16 %v1530
        %v1687 = vunpack.c.l.b16 %v1531
        %v1688 = vunpack.c.l.b16 %v1532
        %v1689 = vunpack.c.l.b16 %v1533
        %v1690 = vunpack.c.l.b16 %v1534
        %v1691 = vunpack.c.l.b16 %v1535
        %v1692 = vunpack.c.l.b16 %v1536
        %v1693 = vunpack.c.l.b16 %v1537
        %v1694 = vunpack.c.l.b16 %v1538
        %v1695 = vunpack.c.l.b16 %v1539
        %v1696 = vunpack.c.l.b16 %v1540
        %v1697 = vunpack.c.l.b16 %v1541
        %v1698 = vunpack.c.l.b16 %v1542
        %v1699 = vunpack.c.l.b16 %v1543
        %v1700 = vunpack.c.l.b16 %v1544
        %v1701 = vunpack.c.l.b16 %v1545
        %v1702 = vunpack.c.l.b16 %v1546
        %v1703 = vunpack.c.l.b16 %v1547
        %v1704 = vunpack.c.l.b16 %v1548
        %v1705 = vunpack.c.l.b16 %v1549
        %v1706 = vunpack.c.l.b16 %v1550
        %v1707 = vunpack.c.l.b16 %v1551
        %v1708 = vunpack.c.l.b16 %v1552
        %v1709 = vunpack.c.l.b16 %v1553
        %v1710 = vunpack.c.l.b16 %v1554
        %v1711 = vunpack.c.l.b16 %v1555
        %v1712 = vunpack.c.l.b16 %v1556
        %v1713 = vunpack.c.l.b16 %v1557
        %v1714 = vunpack.c.l.b16 %v1558
        %v1715 = vunpack.c.l.b16 %v1559
        %v1716 = vunpack.c.l.b16 %v1560
        %v1717 = vunpack.c.l.b16 %v1561
        %v1718 = vunpack.c.l.b16 %v1562
        %v1719 = vunpack.c.l.b16 %v1563
        %v1720 = vunpack.c.l.b16 %v1564
        %v1721 = vunpack.c.l.b16 %v1565
        %v1722 = vunpack.c.l.b16 %v1566
        %v1723 = vunpack.c.l.b16 %v1567
        %v1724 = vunpack.c.l.b16 %v1568
        %v1725 = vunpack.c.l.b16 %v1569
        %v1726 = vunpack.c.l.b16 %v1570
        %v1727 = vunpack.c.l.b16 %v1571
        %v1728 = vunpack.c.l.b16 %v1572
        %v1729 = vunpack.c.l.b16 %v1573
        %v1730 = vunpack.c.l.b16 %v1574
        %v1731 = vunpack.c.l.b16 %v1575
        %v1732 = vunpack.c.l.b16 %v1576
        %v1733 = vunpack.c.l.b16 %v1577
        %v1734 = vunpack.c.l.b16 %v1578
        %v1735 = vunpack.c.l.b16 %v1579
        %v1736 = vunpack.c.l.b16 %v1580
        %v1737 = vunpack.c.l.b16 %v1581
        %v1738 = vunpack.c.l.b16 %v1582
        %v1739 = vunpack.c.l.b16 %v1583
        %v1740 = vunpack.c.l.b16 %v1584
        %v1741 = vunpack.c.l.b16 %v1585
        %v1742 = vunpack.c.l.b16 %v1586
        %v1743 = vunpack.c.l.b16 %v1587
        %v1744 = vunpack.c.l.b16 %v1588
        %v1745 = vunpack.c.l.b16 %v1589
        %v1746 = vunpack.c.l.b16 %v1590
        %v1747 = vunpack.c.l.b16 %v1591
        %v1748 = vunpack.c.l.b16 %v1592
        %v1749 = vunpack.c.l.b16 %v1593
        %v1750 = vunpack.c.l.b16 %v1594
        %v1751 = vunpack.c.l.b16 %v1595
        %v1752 = vunpack.c.l.b16 %v1596
        %v1753 = vunpack.c.l.b16 %v1597
        %v1754 = vunpack.c.l.b16 %v1598
        %v1755 = vunpack.c.l.b16 %v1599
        %v1756 = vunpack.c.l.b16 %v1600
        %v1757 = vunpack.c.l.b16 %v1601
        %v1758 = vunpack.c.l.b16 %v1602
        %v1759 = vunpack.c.l.b16 %v1603
        %v1760 = vpack.c.b16 %v1683, %v1682
        %v1761 = vpack.c.b16 %v1685, %v1684
        %v1762 = vpack.c.b16 %v1687, %v1686
        %v1763 = vpack.c.b16 %v1689, %v1688
        %v1764 = vpack.c.b16 %v1691, %v1690
        %v1765 = vpack.c.b16 %v1693, %v1692
        %v1766 = vpack.c.b16 %v1695, %v1694
        %v1767 = vpack.c.b16 %v1697, %v1696
        %v1768 = vpack.c.b16 %v1699, %v1698
        %v1769 = vpack.c.b16 %v1701, %v1700
        %v1770 = vpack.c.b16 %v1703, %v1702
        %v1771 = vpack.c.b16 %v1705, %v1704
        %v1772 = vpack.c.b16 %v1707, %v1706
        %v1773 = vpack.c.b16 %v1709, %v1708
        %v1774 = vpack.c.b16 %v1711, %v1710
        %v1775 = vpack.c.b16 %v1713, %v1712
        %v1776 = vpack.c.b16 %v1715, %v1714
        %v1777 = vpack.c.b16 %v1717, %v1716
        %v1778 = vpack.c.b16 %v1719, %v1718
        %v1779 = vpack.c.b16 %v1721, %v1720
        %v1780 = vpack.c.b16 %v1723, %v1722
        %v1781 = vpack.c.b16 %v1725, %v1724
        %v1782 = vpack.c.b16 %v1727, %v1726
        %v1783 = vpack.c.b16 %v1729, %v1728
        %v1784 = vpack.c.b16 %v1731, %v1730
        %v1785 = vpack.c.b16 %v1733, %v1732
        %v1786 = vpack.c.b16 %v1735, %v1734
        %v1787 = vpack.c.b16 %v1737, %v1736
        %v1788 = vpack.c.b16 %v1739, %v1738
        %v1789 = vpack.c.b16 %v1741, %v1740
        %v1790 = vpack.c.b16 %v1743, %v1742
        %v1791 = vpack.c.b16 %v1745, %v1744
        %v1792 = vpack.c.b16 %v1747, %v1746
        %v1793 = vpack.c.b16 %v1749, %v1748
        %v1794 = vpack.c.b16 %v1751, %v1750
        %v1795 = vpack.c.b16 %v1753, %v1752
        %v1796 = vpack.c.b16 %v1755, %v1754
        %v1797 = vpack.c.b16 %v1757, %v1756
        %v1798 = vpack.c.b16 %v1759, %v1758
        %vm1838 = vcmask 916480
        %v1840 = vsel %vm1838, %v1525, 0
        %1842 = vmatpush.bf16.msra.mxu0 %v1767
        %1843 = vmatpush.bf16.msra.mxu0 %v1766
        %1844 = vmatpush.bf16.msra.mxu0 %v1765
        %1845 = vmatpush.bf16.msra.mxu0 %v1764
        %1846 = vmatpush.bf16.msra.mxu0 %v1763
        %1847 = vmatpush.bf16.msra.mxu0 %v1762
        %1848 = vmatpush.bf16.msra.mxu0 %v1761
        %1849 = vmatpush.bf16.msra.mxu0 %v1760
        %1850 = vmatmul.bf16.gmra.mxu0 %v1521
        %v1851 = vpop.f32.mrf.mxu0
        %v1852 = vadd.f32 0.0, %v1851
        %v1853 = vpop.f32.mrf.mxu0
        %1854 = vdwg.mxu0
        %1855 = vmatpush.bf16.msra.mxu0 %v1775
        %1856 = vmatpush.bf16.msra.mxu0 %v1774
        %1857 = vmatpush.bf16.msra.mxu0 %v1773
        %1858 = vmatpush.bf16.msra.mxu0 %v1772
        %1859 = vmatpush.bf16.msra.mxu0 %v1771
        %1860 = vmatpush.bf16.msra.mxu0 %v1770
        %1861 = vmatpush.bf16.msra.mxu0 %v1769
        %1862 = vmatpush.bf16.msra.mxu0 %v1768
        %1863 = vmatmul.bf16.gmra.mxu0 %v1522
        %v1864 = vpop.f32.mrf.mxu0
        %v1865 = vadd.f32 %v1852, %v1864
        %v1866 = vpop.f32.mrf.mxu0
        %1867 = vdwg.mxu0
        %1868 = vmatpush.bf16.msra.mxu0 %v1783
        %1869 = vmatpush.bf16.msra.mxu0 %v1782
        %1870 = vmatpush.bf16.msra.mxu0 %v1781
        %1871 = vmatpush.bf16.msra.mxu0 %v1780
        %1872 = vmatpush.bf16.msra.mxu0 %v1779
        %1873 = vmatpush.bf16.msra.mxu0 %v1778
        %1874 = vmatpush.bf16.msra.mxu0 %v1777
        %1875 = vmatpush.bf16.msra.mxu0 %v1776
        %1876 = vmatmul.bf16.gmra.mxu0 %v1523
        %v1877 = vpop.f32.mrf.mxu0
        %v1878 = vadd.f32 %v1865, %v1877
        %v1879 = vpop.f32.mrf.mxu0
        %1880 = vdwg.mxu0
        %1881 = vmatpush.bf16.msra.mxu0 %v1791
        %1882 = vmatpush.bf16.msra.mxu0 %v1790
        %1883 = vmatpush.bf16.msra.mxu0 %v1789
        %1884 = vmatpush.bf16.msra.mxu0 %v1788
        %1885 = vmatpush.bf16.msra.mxu0 %v1787
        %1886 = vmatpush.bf16.msra.mxu0 %v1786
        %1887 = vmatpush.bf16.msra.mxu0 %v1785
        %1888 = vmatpush.bf16.msra.mxu0 %v1784
        %1889 = vmatmul.bf16.gmra.mxu0 %v1524
        %v1890 = vpop.f32.mrf.mxu0
        %v1891 = vadd.f32 %v1878, %v1890
        %v1892 = vpop.f32.mrf.mxu0
        %1893 = vdwg.mxu0
        %1894 = vmatpush.bf16.msra.mxu0 0
        %1895 = vmatpush.bf16.msra.mxu0 %v1798
        %1896 = vmatpush.bf16.msra.mxu0 %v1797
        %1897 = vmatpush.bf16.msra.mxu0 %v1796
        %1898 = vmatpush.bf16.msra.mxu0 %v1795
        %1899 = vmatpush.bf16.msra.mxu0 %v1794
        %1900 = vmatpush.bf16.msra.mxu0 %v1793
        %1901 = vmatpush.bf16.msra.mxu0 %v1792
        %1902 = vmatmul.bf16.gmra.mxu0 %v1840
        %v1903 = vpop.f32.mrf.mxu0
        %v1904 = vadd.f32 %v1891, %v1903
        %v1905 = vpop.f32.mrf.mxu0
        %1906 = vdwg.mxu0
        %v1907 = vmax.f32 %v1904, 0.0
        %v1908 = vpack.c.bf16 %v1907, %v1907
        %v1909 = vld [vmem:[%s3] sm:$0xf]
        %v1910 = vld [vmem:[%s3 + $0x4] sm:$0xf]
        %v1911 = vld [vmem:[%s3 + $0x8] sm:$0xf]
        %v1912 = vld [vmem:[%s3 + $0xc] sm:$0xf]
        %v1913 = vld [vmem:[%s3 + $0x10] sm:$0xf]
        %v1914 = vld [vmem:[%s3 + $0x14] sm:$0xf]
        %v1915 = vld [vmem:[%s3 + $0x18] sm:$0xf]
        %v1916 = vld [vmem:[%s3 + $0x1c] sm:$0xf]
        %v1917 = vld [vmem:[%s3 + $0x20] sm:$0xf]
        %v1918 = vld [vmem:[#allocation2] sm:$0x1]
        %v1920 = vperm.slane %v1918, 0
        %v1931 = vunpack.c.l.b16 %v1909
        %v1932 = vunpack.c.l.b16 %v1910
        %v1933 = vunpack.c.l.b16 %v1911
        %v1934 = vunpack.c.l.b16 %v1912
        %v1935 = vunpack.c.l.b16 %v1913
        %v1936 = vunpack.c.l.b16 %v1914
        %v1937 = vunpack.c.l.b16 %v1915
        %v1938 = vunpack.c.l.b16 %v1916
        %v1939 = vunpack.c.l.b16 %v1917
        %v1940 = vpack.c.b16 %v1932, %v1931
        %v1941 = vpack.c.b16 %v1934, %v1933
        %v1942 = vpack.c.b16 %v1936, %v1935
        %v1943 = vpack.c.b16 %v1938, %v1937
        %v1944 = vpack.c.b16 %v1939, %v1939
        %vm1949 = vcmask 588800
        %v1951 = vsel %vm1949, %v1908, 0
        %vm1953 = vcmask 1043456
        %v1955 = vsel %vm1953, %v1944, 0
        %1957 = vmatpush.bf16.msra.mxu0 0
        %1958 = vmatpush.bf16.msra.mxu0 0
        %1959 = vmatpush.bf16.msra.mxu0 0
        %1960 = vmatpush.bf16.msra.mxu0 %v1955
        %1961 = vmatpush.bf16.msra.mxu0 %v1943
        %1962 = vmatpush.bf16.msra.mxu0 %v1942
        %1963 = vmatpush.bf16.msra.mxu0 %v1941
        %1964 = vmatpush.bf16.msra.mxu0 %v1940
        %1965 = vmatmul.bf16.gmra.mxu0 %v1951
        %v1966 = vpop.f32.mrf.mxu0
        %v1967 = vadd.f32 %v1920, %v1966
        %v1968 = vpop.f32.mrf.mxu0
        %1969 = vdwg.mxu0
        %v1970 = vsub.f32 0.0, %v1967
        %v1971 = vmul.f32 %v1970, 1.442695
        %v1972 = vpow.pop %v1971
        %v1973 = vadd.f32 %v1972, 1.0
        %v1974 = vrcp.pop %v1973
        %v1975 = vmul.f32 %v1973, %v1974
        %v1976 = vsub.f32 1.0, %v1975
        %v1977 = vmul.f32 %v1974, %v1976
        %v1978 = vadd.f32 %v1974, %v1977
        %vm1979 = vweird.f32 %v1973
        %vm1980 = vweird.f32 %v1974
        %vm1981 = vmor %vm1979, %vm1980
        %v1982 = vsel %vm1981, %v1974, %v1978
        %v1983 = vand.u32 2147483647, %v1973
        %vm1984 = vcmp.eq.f32.partialorder %v1983, 8.507059e+37
        %v1985 = vand.u32 %v1973, 2147483648
        %v1986 = vor.u32 1.1754944e-38, %v1985
        %v1987 = vsel %vm1984, %v1986, %v1982
        %v1988 = vmul.f32 1.0, %v1987
        %v1989 = vld [vmem:[%s5] sm:$0xf]
        %v1990 = vld [vmem:[%s5 + $0x4] sm:$0xf]
        %v1991 = vld [vmem:[%s5 + $0x8] sm:$0xf]
        %v1992 = vld [vmem:[%s5 + $0xc] sm:$0xf]
        %v1993 = vld [vmem:[%s5 + $0x10] sm:$0xf]
        %v1994 = vld [vmem:[%s5 + $0x14] sm:$0xf]
        %v1995 = vld [vmem:[%s5 + $0x18] sm:$0xf]
        %v1996 = vld [vmem:[%s5 + $0x1c] sm:$0xf]
        %v1997 = vld [vmem:[%s5 + $0x20] sm:$0xf]
        %v1998 = vld [vmem:[%s6] sm:$0x1]
        %v2000 = vperm.slane %v1998, 0
        %v2011 = vunpack.c.l.b16 %v1989
        %v2012 = vunpack.c.l.b16 %v1990
        %v2013 = vunpack.c.l.b16 %v1991
        %v2014 = vunpack.c.l.b16 %v1992
        %v2015 = vunpack.c.l.b16 %v1993
        %v2016 = vunpack.c.l.b16 %v1994
        %v2017 = vunpack.c.l.b16 %v1995
        %v2018 = vunpack.c.l.b16 %v1996
        %v2019 = vunpack.c.l.b16 %v1997
        %v2020 = vpack.c.b16 %v2012, %v2011
        %v2021 = vpack.c.b16 %v2014, %v2013
        %v2022 = vpack.c.b16 %v2016, %v2015
        %v2023 = vpack.c.b16 %v2018, %v2017
        %v2024 = vpack.c.b16 %v2019, %v2019
        %v2030 = vsel %vm1953, %v2024, 0
        %2032 = vmatpush.bf16.msra.mxu0 0
        %2033 = vmatpush.bf16.msra.mxu0 0
        %2034 = vmatpush.bf16.msra.mxu0 0
        %2035 = vmatpush.bf16.msra.mxu0 %v2030
        %2036 = vmatpush.bf16.msra.mxu0 %v2023
        %2037 = vmatpush.bf16.msra.mxu0 %v2022
        %2038 = vmatpush.bf16.msra.mxu0 %v2021
        %2039 = vmatpush.bf16.msra.mxu0 %v2020
        %2040 = vmatmul.bf16.gmra.mxu0 %v1951
        %v2041 = vpop.f32.mrf.mxu0
        %v2042 = vadd.f32 %v2000, %v2041
        %v2043 = vpop.f32.mrf.mxu0
        %2044 = vdwg.mxu0
        %v2045 = vmax.f32 %v2042, 0.0
        %v2046 = vpack.c.bf16 %v2045, %v2045
        %v2047 = vld [vmem:[%s7] sm:$0xf]
        %v2048 = vld [vmem:[%s7 + $0x4] sm:$0xf]
        %v2049 = vld [vmem:[%s7 + $0x8] sm:$0xf]
        %v2050 = vld [vmem:[%s7 + $0xc] sm:$0xf]
        %v2051 = vld [vmem:[%s7 + $0x10] sm:$0xf]
        %v2052 = vld [vmem:[%s7 + $0x14] sm:$0xf]
        %v2053 = vld [vmem:[%s7 + $0x18] sm:$0xf]
        %v2054 = vld [vmem:[%s7 + $0x1c] sm:$0xf]
        %v2055 = vld [vmem:[%s8] sm:$0x1]
        %v2057 = vperm.slane %v2055, 0
        %v2067 = vunpack.c.l.b16 %v2047
        %v2068 = vunpack.c.l.b16 %v2048
        %v2069 = vunpack.c.l.b16 %v2049
        %v2070 = vunpack.c.l.b16 %v2050
        %v2071 = vunpack.c.l.b16 %v2051
        %v2072 = vunpack.c.l.b16 %v2052
        %v2073 = vunpack.c.l.b16 %v2053
        %v2074 = vunpack.c.l.b16 %v2054
        %v2075 = vpack.c.b16 %v2068, %v2067
        %v2076 = vpack.c.b16 %v2070, %v2069
        %v2077 = vpack.c.b16 %v2072, %v2071
        %v2078 = vpack.c.b16 %v2074, %v2073
        %vm2083 = vcmask 523264
        %v2085 = vsel %vm2083, %v2046, 0
        %2087 = vmatpush.bf16.msra.mxu0 0
        %2088 = vmatpush.bf16.msra.mxu0 0
        %2089 = vmatpush.bf16.msra.mxu0 0
        %2090 = vmatpush.bf16.msra.mxu0 0
        %2091 = vmatpush.bf16.msra.mxu0 %v2078
        %2092 = vmatpush.bf16.msra.mxu0 %v2077
        %2093 = vmatpush.bf16.msra.mxu0 %v2076
        %2094 = vmatpush.bf16.msra.mxu0 %v2075
        %2095 = vmatmul.bf16.gmra.mxu0 %v2085
        %v2096 = vpop.f32.mrf.mxu0
        %v2097 = vadd.f32 %v2057, %v2096
        %v2098 = vpop.f32.mrf.mxu0
        %2099 = vdwg.mxu0
        %v2100 = vmax.f32 %v2097, 0.0
        %v2101 = vpack.c.bf16 %v2100, %v2100
        %v2102 = vld [vmem:[%s9] sm:$0xf]
        %v2103 = vld [vmem:[%s9 + $0x4] sm:$0xf]
        %v2104 = vld [vmem:[%s9 + $0x8] sm:$0xf]
        %v2105 = vld [vmem:[%s9 + $0xc] sm:$0xf]
        %v2106 = vld [vmem:[%s10] sm:$0x1]
        %v2108 = vperm.slane %v2106, 0
        %v2114 = vunpack.c.l.b16 %v2102
        %v2115 = vunpack.c.l.b16 %v2103
        %v2116 = vunpack.c.l.b16 %v2104
        %v2117 = vunpack.c.l.b16 %v2105
        %v2118 = vpack.c.b16 %v2115, %v2114
        %v2119 = vpack.c.b16 %v2117, %v2116
        %v2123 = vsel %vm1252, %v2101, 0
        %2125 = vmatpush.bf16.msra.mxu0 0
        %2126 = vmatpush.bf16.msra.mxu0 0
        %2127 = vmatpush.bf16.msra.mxu0 0
        %2128 = vmatpush.bf16.msra.mxu0 0
        %2129 = vmatpush.bf16.msra.mxu0 0
        %2130 = vmatpush.bf16.msra.mxu0 0
        %2131 = vmatpush.bf16.msra.mxu0 %v2119
        %2132 = vmatpush.bf16.msra.mxu0 %v2118
        %2133 = vmatmul.bf16.gmra.mxu0 %v2123
        %v2134 = vpop.f32.mrf.mxu0
        %v2135 = vadd.f32 %v2108, %v2134
        %v2136 = vpop.f32.mrf.mxu0
        %2137 = vdwg.mxu0
        %vm2138 = vcmask 31744
        %2139 = vst.msk [vmem:[%s403] sm:$0xff] %vm2138, %v2135
        %2141 = vrot.lane.b32.xlu0 %v1988, 4
        %v2142 = vpop.permute.xlu0 %2141
        %vm2144 = vcmask 39968
        %2145 = vst.msk [vmem:[%s403] sm:$0xff] %vm2144, %v2142
        %p2146 = scmp.lt.s32.totalorder %s25, 1
        %s2147 = scalar_select %p2146, %s25, 1
        %s2148 = smul.addr %s2147, 8
        %s2149 = scalar_lea.vmem %s11, %s2148
        // Predicated region
        $region69: #{hybjim_forward.1} parent=63 // pred_check
          %p2150 = pneg %p279
        $region70: #{hybjim_forward.1} parent=63 // pred_check_branch
          %2152 = sbr.rel (%p2150) target = $region72
        $region71: #{hybjim_forward.1} parent=63 // pred_region
          _
        $region72: #{hybjim_forward.1} parent=63 // pred_fallthru
          _
      $region64: #{hybjim_forward.1} parent=5 // pred_fallthru
        _
      %p2153 = scmp.le.s32.totalorder 2, %s20
      // Predicated region
      $region73: #{hybjim_forward.1} parent=5 // pred_check
        %p2154 = pneg %p2153
      $region74: #{hybjim_forward.1} parent=5 // pred_check_branch
        %2156 = sbr.rel (%p2154) target = $region76
      $region75: #{hybjim_forward.1} parent=5 // pred_region
        %s2157 = ssub.s32 %s20, 2
        // Predicated region
        $region77: #{hybjim_forward.1} parent=75 // pred_check
          %p2158 = pneg %p285
        $region78: #{hybjim_forward.1} parent=75 // pred_check_branch
          %2160 = sbr.rel (%p2158) target = $region80
        $region79: #{hybjim_forward.1} parent=75 // pred_region
          %p2161 = scmp.lt.s32.totalorder %s26, 1
          %s2162 = scalar_select %p2161, %s26, 1
          %s2163 = smul.addr %s2162, 8
          %s2164 = scalar_lea.vmem %s11, %s2163
        $region80: #{hybjim_forward.1} parent=75 // pred_fallthru
          _
      $region76: #{hybjim_forward.1} parent=5 // pred_fallthru
        _
    $region6: #{hybjim_forward.1} parent=1 // loop_footer
      %s24 = sadd.s32 1, %s20
    $region7: #{hybjim_forward.1} parent=1 // loop_footer_branch
      %19 = sbr.rel target = $region3
    $region8: #{hybjim_forward.1} parent=1 // loop_exit
      _
    %2165 = vsyncpa [#allocation4], 1
    %s2166 = scalar_lea.sflag [#allocation4], 1
    %2167 = vsyncpa %s2166, 1

</llo_original>
